<compile_context>
chip_gen: v5e
topology: v5e:2x2
jax: 0.10.0
libtpu: 0.0.40
codegen_flags: <defaults>
</compile_context>

<pallas_src>
import functools

import jax
import jax.numpy as jnp
import numpy as np
from jax.experimental import pallas as pl
from jax.experimental.pallas import tpu as pltpu


# ---------------------------------------------------------------------------
# Pass 1: K / V projections (computed once, reused by every query block).
# ---------------------------------------------------------------------------
def _kv_proj_kernel(k_ref, v_ref, wk_ref, bk_ref, wv_ref, bv_ref,
                    kp_ref, vp_ref):
    kp_ref[0] = (jnp.dot(k_ref[0], wk_ref[...],
                         preferred_element_type=jnp.float32)
                 + bk_ref[...]).astype(jnp.bfloat16)
    vp_ref[0] = (jnp.dot(v_ref[0], wv_ref[...],
                         preferred_element_type=jnp.float32)
                 + bv_ref[...]).astype(jnp.bfloat16)


def _project_kv(kb, vb, wk, bk, wv, bv, *, block_r):
    B, Lk, D = kb.shape
    row_map = lambda b, r: (b, r, 0)
    w_map = lambda b, r: (0, 0)

    flops = int(4 * B * Lk * D * D)
    bytes_accessed = int(2 * B * Lk * D * 2      # raw k, v (bf16) in
                         + 2 * D * D * 2 + 2 * D * 4
                         + 2 * B * Lk * D * 2)   # projected k, v (bf16) out

    return pl.pallas_call(
        _kv_proj_kernel,
        out_shape=(jax.ShapeDtypeStruct((B, Lk, D), jnp.bfloat16),
                   jax.ShapeDtypeStruct((B, Lk, D), jnp.bfloat16)),
        grid_spec=pltpu.PrefetchScalarGridSpec(
            num_scalar_prefetch=0,
            grid=(B, Lk // block_r),
            in_specs=[
                pl.BlockSpec((1, block_r, D), row_map),   # k rows
                pl.BlockSpec((1, block_r, D), row_map),   # v rows
                pl.BlockSpec((D, D), w_map),              # Wk (in, out)
                pl.BlockSpec((1, D), w_map),              # bk
                pl.BlockSpec((D, D), w_map),              # Wv
                pl.BlockSpec((1, D), w_map),              # bv
            ],
            out_specs=[pl.BlockSpec((1, block_r, D), row_map),
                       pl.BlockSpec((1, block_r, D), row_map)],
        ),
        compiler_params=pltpu.CompilerParams(
            dimension_semantics=("parallel", "parallel"),
            vmem_limit_bytes=32 * 1024 * 1024,
        ),
        cost_estimate=pl.CostEstimate(flops=flops, transcendentals=0,
                                      bytes_accessed=bytes_accessed),
    )(kb, vb, wk, bk, wv, bv)


# ---------------------------------------------------------------------------
# Pass 2: Q projection + flash attention + output projection (fused).
# ---------------------------------------------------------------------------
def _mhsa_flash_kernel(q_ref, kp_ref, vp_ref, mask_ref,
                       wq_ref, bq_ref, wo_ref, bo_ref,
                       out_ref,
                       qp_scr, acc_scr, m_scr, l_scr,
                       *, num_heads, head_dim, scale):
    ki = pl.program_id(2)

    @pl.when(ki == 0)
    def _init():
        # Q projection for this (batch, q-block); fold the softmax scale in once.
        qp = jnp.dot(q_ref[0], wq_ref[...],
                     preferred_element_type=jnp.float32) + bq_ref[...]
        qp_scr[...] = (qp * scale).astype(jnp.bfloat16)
        m_scr[...] = jnp.full_like(m_scr, -jnp.inf)
        l_scr[...] = jnp.zeros_like(l_scr)
        acc_scr[...] = jnp.zeros_like(acc_scr)

    kp = kp_ref[0]                                  # (block_k, D) bf16, projected
    vp = vp_ref[0]                                  # (block_k, D) bf16, projected
    masked = mask_ref[0] == 0                       # (block_q, block_k), once

    # Static per-head loop over lane-dense slices (no XLU transposes).
    for h in range(num_heads):
        sl = pl.ds(h * head_dim, head_dim)
        qh = qp_scr[:, sl]                          # (block_q, hd) bf16, scaled
        kh = kp[:, sl]                              # (block_k, hd) bf16
        vh = vp[:, sl]                              # (block_k, hd) bf16

        # Scores: contract over head_dim on both operands (no explicit .T).
        s = jax.lax.dot_general(qh, kh,
                                dimension_numbers=(((1,), (1,)), ((), ())),
                                preferred_element_type=jnp.float32)
        s = jnp.where(masked, jnp.float32(-1e9), s)     # masked_fill semantics

        m_prev = m_scr[:, h:h + 1]                  # (block_q, 1)
        l_prev = l_scr[:, h:h + 1]
        m_new = jnp.maximum(m_prev, jnp.max(s, axis=-1, keepdims=True))
        alpha = jnp.exp(m_prev - m_new)
        p = jnp.exp(s - m_new)                      # (block_q, block_k) f32

        m_scr[:, h:h + 1] = m_new
        l_scr[:, h:h + 1] = alpha * l_prev + jnp.sum(p, axis=-1, keepdims=True)
        acc_scr[:, sl] = (alpha * acc_scr[:, sl]
                          + jnp.dot(p.astype(jnp.bfloat16), vh,
                                    preferred_element_type=jnp.float32))

    @pl.when(ki == pl.num_programs(2) - 1)
    def _finalize():
        # Per-head normalization via EUP reciprocal, then one output projection.
        inv_l = pl.reciprocal(l_scr[...], approx=True)          # (block_q, H)
        for h in range(num_heads):
            sl = pl.ds(h * head_dim, head_dim)
            acc_scr[:, sl] = acc_scr[:, sl] * inv_l[:, h:h + 1]
        out_ref[0] = (jnp.dot(acc_scr[...].astype(jnp.bfloat16), wo_ref[...],
                              preferred_element_type=jnp.float32)
                      + bo_ref[...])


def multi_head_self_attention(q, k, v, mask, params, *, num_heads,
                              block_q=128, block_k=128, block_r=256):
    """q: (B, Lq, D); k, v: (B, Lk, D); mask: (B, Lq, Lk) with {0, 1}."""
    B, Lq, D = q.shape
    Lk = k.shape[1]
    assert D % num_heads == 0
    head_dim = D // num_heads
    scale = float(head_dim) ** -0.5

    block_q = min(block_q, Lq)
    block_k = min(block_k, Lk)
    block_r = min(block_r, Lk)
    if Lk % block_r != 0:
        block_r = block_k
    assert Lq % block_q == 0 and Lk % block_k == 0 and Lk % block_r == 0, \
        "sequence lengths must tile"

    # bf16 operands for the MXU; biases / accumulation / softmax stay f32.
    qb = q.astype(jnp.bfloat16)
    kb = k.astype(jnp.bfloat16)
    vb = v.astype(jnp.bfloat16)
    maskb = mask.astype(jnp.bfloat16)
    wq = params["wq"].astype(jnp.bfloat16)
    wk = params["wk"].astype(jnp.bfloat16)
    wv = params["wv"].astype(jnp.bfloat16)
    wo = params["wo"].astype(jnp.bfloat16)
    bq, bk_, bv_, bo = params["bq"], params["bk"], params["bv"], params["bo"]

    # Pass 1: project K / V exactly once (reused by every query block below).
    kp, vp = _project_kv(kb, vb, wk, bk_, wv, bv_, block_r=block_r)

    kernel = functools.partial(_mhsa_flash_kernel, num_heads=num_heads,
                               head_dim=head_dim, scale=scale)

    grid = (B, Lq // block_q, Lk // block_k)
    q_map = lambda b, qi, ki: (b, qi, 0)
    kv_map = lambda b, qi, ki: (b, ki, 0)
    mask_map = lambda b, qi, ki: (b, qi, ki)
    w_map = lambda b, qi, ki: (0, 0)

    n_qblk = Lq // block_q
    flops = int(4 * B * Lq * D * D + 4 * B * Lq * Lk * D)
    transcendentals = int(B * num_heads * Lq * Lk)
    bytes_accessed = int(B * Lq * D * 2                       # q (bf16)
                         + 2 * n_qblk * B * Lk * D * 2        # kp, vp per q-block
                         + B * Lq * Lk * 2                    # mask (bf16)
                         + 2 * D * D * 2 + 2 * D * 4          # Wq, Wo, biases
                         + B * Lq * D * 4)                    # output (f32)

    return pl.pallas_call(
        kernel,
        out_shape=jax.ShapeDtypeStruct((B, Lq, D), jnp.float32),
        grid_spec=pltpu.PrefetchScalarGridSpec(
            num_scalar_prefetch=0,
            grid=grid,
            in_specs=[
                pl.BlockSpec((1, block_q, D), q_map),            # q (raw)
                pl.BlockSpec((1, block_k, D), kv_map),           # projected K
                pl.BlockSpec((1, block_k, D), kv_map),           # projected V
                pl.BlockSpec((1, block_q, block_k), mask_map),   # mask
                pl.BlockSpec((D, D), w_map),                     # Wq (in, out)
                pl.BlockSpec((1, D), w_map),                     # bq
                pl.BlockSpec((D, D), w_map),                     # Wo
                pl.BlockSpec((1, D), w_map),                     # bo
            ],
            out_specs=pl.BlockSpec((1, block_q, D), q_map),
            scratch_shapes=[
                pltpu.VMEM((block_q, D), jnp.bfloat16),          # scaled Q proj
                pltpu.VMEM((block_q, D), jnp.float32),           # output acc
                pltpu.VMEM((block_q, num_heads), jnp.float32),   # running max m
                pltpu.VMEM((block_q, num_heads), jnp.float32),   # running sum l
            ],
        ),
        compiler_params=pltpu.CompilerParams(
            dimension_semantics=("parallel", "parallel", "arbitrary"),
            vmem_limit_bytes=32 * 1024 * 1024,
        ),
        cost_estimate=pl.CostEstimate(flops=flops,
                                      transcendentals=transcendentals,
                                      bytes_accessed=bytes_accessed),
    )(qb, kp, vp, maskb, wq, bq, wo, bo)


# ---------------------------------------------------------------------------
# Pure-JAX reference + deterministic test harness.
# ---------------------------------------------------------------------------
def _reference(q, k, v, mask, params, *, num_heads):
    """Pure-JAX f32 reference mirroring the PyTorch forward."""
    B, Lq, D = q.shape
    Lk = k.shape[1]
    hd = D // num_heads
    scale = float(hd) ** -0.5

    def proj(x, w, b):
        return x @ w + b[0]

    qp = proj(q, params["wq"], params["bq"]).reshape(B, Lq, num_heads, hd).transpose(0, 2, 1, 3)
    kp = proj(k, params["wk"], params["bk"]).reshape(B, Lk, num_heads, hd).transpose(0, 2, 1, 3)
    vp = proj(v, params["wv"], params["bv"]).reshape(B, Lk, num_heads, hd).transpose(0, 2, 1, 3)

    attn = jnp.einsum('bhqd,bhkd->bhqk', qp, kp) * scale
    attn = jnp.where(mask[:, None, :, :] == 0.0, -1e9, attn)
    attn = jax.nn.softmax(attn, axis=-1)
    out = jnp.einsum('bhqk,bhkd->bhqd', attn, vp).transpose(0, 2, 1, 3).reshape(B, Lq, D)
    return proj(out, params["wo"], params["bo"])


def _init_params(key, embed_dim):
    """Deterministic nn.Linear-style init; weights stored as (in, out)."""
    ks = jax.random.split(key, 8)
    bound = 1.0 / float(np.sqrt(embed_dim))

    def w(k):
        return jax.random.uniform(k, (embed_dim, embed_dim), jnp.float32, -bound, bound)

    def b(k):
        return jax.random.uniform(k, (1, embed_dim), jnp.float32, -bound, bound)

    return dict(wq=w(ks[0]), bq=b(ks[1]),
                wk=w(ks[2]), bk=b(ks[3]),
                wv=w(ks[4]), bv=b(ks[5]),
                wo=w(ks[6]), bo=b(ks[7]))


if __name__ == "__main__":
    # Small but tiling-exercising shapes: 2x2x2 grid of 128-wide blocks,
    # head_dim = 64 (same head size as the module's 512/8 default).
    B, L, D, H = 2, 256, 256, 4

    key = jax.random.PRNGKey(0)
    kq, kk, kv, kp_ = jax.random.split(key, 4)
    q = jax.random.normal(kq, (B, L, D), jnp.float32)
    k = jax.random.normal(kk, (B, L, D), jnp.float32)
    v = jax.random.normal(kv, (B, L, D), jnp.float32)

    # Causal mask (1 = attend, 0 = masked), broadcast over heads like mask.unsqueeze(1).
    mask = jnp.tril(jnp.ones((L, L), jnp.float32))[None].repeat(B, axis=0)

    params = _init_params(kp_, D)

    out = multi_head_self_attention(q, k, v, mask, params, num_heads=H)
    out = jax.block_until_ready(out)

    ref = _reference(q, k, v, mask, params, num_heads=H)
    # bf16 MXU operands with f32 accumulation -> looser tolerance than pure f32.
    np.testing.assert_allclose(np.asarray(out), np.asarray(ref),
                               rtol=3e-2, atol=3e-2)

    print("KERNEL_OK")
</pallas_src>

<mosaic_0001>
module attributes {stable_mosaic.version = 11 : i64} {
  func.func @_kv_proj_kernel(%arg0: i32, %arg1: i32, %arg2: memref<1x256x256xbf16, #tpu.memory_space<vmem>>, %arg3: memref<1x256x256xbf16, #tpu.memory_space<vmem>>, %arg4: memref<256x256xbf16, #tpu.memory_space<vmem>>, %arg5: memref<1x256xf32, #tpu.memory_space<vmem>>, %arg6: memref<256x256xbf16, #tpu.memory_space<vmem>>, %arg7: memref<1x256xf32, #tpu.memory_space<vmem>>, %arg8: memref<1x256x256xbf16, #tpu.memory_space<vmem>>, %arg9: memref<1x256x256xbf16, #tpu.memory_space<vmem>>) attributes {dimension_semantics = [#tpu.dimension_semantics<parallel>, #tpu.dimension_semantics<parallel>], iteration_bounds = array<i64: 2, 1>, scalar_prefetch = 0 : i64, scratch_operands = 0 : i64, tpu.core_type = #tpu.core_type<tc>, window_params = [{transform_indices = @transform_0, window_bounds = array<i64: 1, 256, 256>}, {transform_indices = @transform_1, window_bounds = array<i64: 1, 256, 256>}, {pipeline_mode = #tpu.pipeline_mode<synchronous>, transform_indices = @transform_2, window_bounds = array<i64: 256, 256>}, {pipeline_mode = #tpu.pipeline_mode<synchronous>, transform_indices = @transform_3, window_bounds = array<i64: 1, 256>}, {pipeline_mode = #tpu.pipeline_mode<synchronous>, transform_indices = @transform_4, window_bounds = array<i64: 256, 256>}, {pipeline_mode = #tpu.pipeline_mode<synchronous>, transform_indices = @transform_5, window_bounds = array<i64: 1, 256>}, {transform_indices = @transform_6, window_bounds = array<i64: 1, 256, 256>}, {transform_indices = @transform_7, window_bounds = array<i64: 1, 256, 256>}]} {
    %c0 = arith.constant 0 : index
    %c0_0 = arith.constant 0 : index
    %c0_1 = arith.constant 0 : index
    %0 = vector.load %arg2[%c0, %c0_0, %c0_1] : memref<1x256x256xbf16, #tpu.memory_space<vmem>>, vector<1x256x256xbf16>
    %1 = vector.shape_cast %0 : vector<1x256x256xbf16> to vector<256x256xbf16>
    %c0_2 = arith.constant 0 : index
    %c0_3 = arith.constant 0 : index
    %2 = vector.load %arg4[%c0_2, %c0_3] : memref<256x256xbf16, #tpu.memory_space<vmem>>, vector<256x256xbf16>
    %cst = arith.constant dense<0.000000e+00> : vector<256x256xf32>
    %3 = tpu.matmul %1, %2, %cst {dimension_numbers = #tpu.dot_dimension_numbers<[1], [0], [0], [1], [0, 0, 1, 1], [], []>} : vector<256x256xbf16>, vector<256x256xbf16>, vector<256x256xf32> -> vector<256x256xf32>
    %c0_4 = arith.constant 0 : index
    %c0_5 = arith.constant 0 : index
    %4 = vector.load %arg5[%c0_4, %c0_5] : memref<1x256xf32, #tpu.memory_space<vmem>>, vector<1x256xf32>
    %5 = vector.broadcast %4 : vector<1x256xf32> to vector<256x256xf32>
    %6 = arith.addf %3, %5 : vector<256x256xf32>
    %7 = arith.truncf %6 : vector<256x256xf32> to vector<256x256xbf16>
    %c0_6 = arith.constant 0 : index
    %c0_7 = arith.constant 0 : index
    %c0_8 = arith.constant 0 : index
    %8 = vector.load %arg8[%c0_6, %c0_7, %c0_8] : memref<1x256x256xbf16, #tpu.memory_space<vmem>>, vector<1x256x256xbf16>
    %9 = vector.shape_cast %8 : vector<1x256x256xbf16> to vector<256x256xbf16>
    %10 = vector.shape_cast %7 : vector<256x256xbf16> to vector<1x256x256xbf16>
    tpu.vector_store %arg8[%c0_6, %c0_7, %c0_8], %10 {strides = array<i32>} : memref<1x256x256xbf16, #tpu.memory_space<vmem>>, vector<1x256x256xbf16>,
    %c0_9 = arith.constant 0 : index
    %c0_10 = arith.constant 0 : index
    %c0_11 = arith.constant 0 : index
    %11 = vector.load %arg3[%c0_9, %c0_10, %c0_11] : memref<1x256x256xbf16, #tpu.memory_space<vmem>>, vector<1x256x256xbf16>
    %12 = vector.shape_cast %11 : vector<1x256x256xbf16> to vector<256x256xbf16>
    %c0_12 = arith.constant 0 : index
    %c0_13 = arith.constant 0 : index
    %13 = vector.load %arg6[%c0_12, %c0_13] : memref<256x256xbf16, #tpu.memory_space<vmem>>, vector<256x256xbf16>
    %cst_14 = arith.constant dense<0.000000e+00> : vector<256x256xf32>
    %14 = tpu.matmul %12, %13, %cst_14 {dimension_numbers = #tpu.dot_dimension_numbers<[1], [0], [0], [1], [0, 0, 1, 1], [], []>} : vector<256x256xbf16>, vector<256x256xbf16>, vector<256x256xf32> -> vector<256x256xf32>
    %c0_15 = arith.constant 0 : index
    %c0_16 = arith.constant 0 : index
    %15 = vector.load %arg7[%c0_15, %c0_16] : memref<1x256xf32, #tpu.memory_space<vmem>>, vector<1x256xf32>
    %16 = vector.broadcast %15 : vector<1x256xf32> to vector<256x256xf32>
    %17 = arith.addf %14, %16 : vector<256x256xf32>
    %18 = arith.truncf %17 : vector<256x256xf32> to vector<256x256xbf16>
    %c0_17 = arith.constant 0 : index
    %c0_18 = arith.constant 0 : index
    %c0_19 = arith.constant 0 : index
    %19 = vector.load %arg9[%c0_17, %c0_18, %c0_19] : memref<1x256x256xbf16, #tpu.memory_space<vmem>>, vector<1x256x256xbf16>
    %20 = vector.shape_cast %19 : vector<1x256x256xbf16> to vector<256x256xbf16>
    %21 = vector.shape_cast %18 : vector<256x256xbf16> to vector<1x256x256xbf16>
    tpu.vector_store %arg9[%c0_17, %c0_18, %c0_19], %21 {strides = array<i32>} : memref<1x256x256xbf16, #tpu.memory_space<vmem>>, vector<1x256x256xbf16>,
    return
  }
  func.func @transform_0(%arg0: i32, %arg1: i32) -> (i32, i32, i32) {
    %c0_i32 = arith.constant 0 : i32
    %c0_i32_0 = arith.constant 0 : i32
    return %arg0, %arg1, %c0_i32 : i32, i32, i32
  }
  func.func @transform_1(%arg0: i32, %arg1: i32) -> (i32, i32, i32) {
    %c0_i32 = arith.constant 0 : i32
    %c0_i32_0 = arith.constant 0 : i32
    return %arg0, %arg1, %c0_i32 : i32, i32, i32
  }
  func.func @transform_2(%arg0: i32, %arg1: i32) -> (i32, i32) {
    %c0_i32 = arith.constant 0 : i32
    %c0_i32_0 = arith.constant 0 : i32
    %c0_i32_1 = arith.constant 0 : i32
    return %c0_i32, %c0_i32_0 : i32, i32
  }
  func.func @transform_3(%arg0: i32, %arg1: i32) -> (i32, i32) {
    %c0_i32 = arith.constant 0 : i32
    %c0_i32_0 = arith.constant 0 : i32
    %c0_i32_1 = arith.constant 0 : i32
    return %c0_i32, %c0_i32_0 : i32, i32
  }
  func.func @transform_4(%arg0: i32, %arg1: i32) -> (i32, i32) {
    %c0_i32 = arith.constant 0 : i32
    %c0_i32_0 = arith.constant 0 : i32
    %c0_i32_1 = arith.constant 0 : i32
    return %c0_i32, %c0_i32_0 : i32, i32
  }
  func.func @transform_5(%arg0: i32, %arg1: i32) -> (i32, i32) {
    %c0_i32 = arith.constant 0 : i32
    %c0_i32_0 = arith.constant 0 : i32
    %c0_i32_1 = arith.constant 0 : i32
    return %c0_i32, %c0_i32_0 : i32, i32
  }
  func.func @transform_6(%arg0: i32, %arg1: i32) -> (i32, i32, i32) {
    %c0_i32 = arith.constant 0 : i32
    %c0_i32_0 = arith.constant 0 : i32
    return %arg0, %arg1, %c0_i32 : i32, i32, i32
  }
  func.func @transform_7(%arg0: i32, %arg1: i32) -> (i32, i32, i32) {
    %c0_i32 = arith.constant 0 : i32
    %c0_i32_0 = arith.constant 0 : i32
    return %arg0, %arg1, %c0_i32 : i32, i32, i32
  }
}

</mosaic_0001>

<llo_original>
// kernel: tpu_custom_call.1
$region0: #{tpu_custom_call.1}
  #allocation0 [shape = 'u32[]', space=smem, size = 0x4, offset = 0x4, fixed_abs, tag = 'smem constant byte address 0x4 - core index']
  #allocation1 [shape = 'u32[72,128]{1,0:T(1,128)}', space=vmem, size = 0x9000, scoped, tag = 'internal scratch']
  %s0 = inlined_call_operand.hbm [shape: bf16[2,256,256], index: 0, kind: input, shape index: {}]
  %s1 = inlined_call_operand.hbm [shape: bf16[2,256,256], index: 1, kind: input, shape index: {}]
  %s2 = inlined_call_operand.hbm [shape: bf16[256,256], index: 2, kind: input, shape index: {}]
  %s3 = inlined_call_operand.vmem [shape: f32[1,256], index: 3, kind: input, shape index: {}]
  %s4 = inlined_call_operand.hbm [shape: bf16[256,256], index: 4, kind: input, shape index: {}]
  %s5 = inlined_call_operand.vmem [shape: f32[1,256], index: 5, kind: input, shape index: {}]
  %s6 = inlined_call_operand.hbm [shape: bf16[2,256,256], index: 6, kind: output, shape index: {0}]
  %s7 = inlined_call_operand.hbm [shape: bf16[2,256,256], index: 7, kind: output, shape index: {1}]
  %8 = xla_tuple %s6, %s7
  %s9 = sld [smem:[#allocation0]]
  $region81: #{tpu_custom_call.1} parent=0
    _
  %s11 = ssub.s32 1, %s9
  %s12 = scalar_select 0, %s11, %s9
  $region1: #{tpu_custom_call.1} parent=0
    #allocation2 [shape = 'u8[262144]{0}', space=vmem, size = 0x40000, scoped, tag = 'input window, operand 0']
    #allocation3 [shape = 's32[2]{0}', space=sflag, size = 0x8, scoped, tag = 'scoped memory for tpu_custom_call.1']
    #allocation4 [shape = 's32[2]{0}', space=sflag, size = 0x8, scoped, tag = 'scoped memory for tpu_custom_call.1']
    #allocation5 [shape = 'u8[262144]{0}', space=vmem, size = 0x40000, scoped, tag = 'input window, operand 1']
    #allocation6 [shape = 's32[2]{0}', space=sflag, size = 0x8, scoped, tag = 'scoped memory for tpu_custom_call.1']
    #allocation7 [shape = 'u8[131072]{0}', space=vmem, size = 0x20000, scoped, tag = 'input window, operand 2, single buffered']
    #allocation8 [shape = 'u8[131072]{0}', space=vmem, size = 0x20000, scoped, tag = 'input window, operand 4, single buffered']
    #allocation9 [shape = 's32[1]{0}', space=sflag, size = 0x4, scoped, tag = 'scoped memory for tpu_custom_call.1']
    #allocation10 [shape = 'u8[262144]{0}', space=vmem, size = 0x40000, scoped, tag = 'output window, operand 0']
    #allocation11 [shape = 'u8[262144]{0}', space=vmem, size = 0x40000, scoped, tag = 'output window, operand 1']
    #allocation12 [shape = 's32[2]{0}', space=sflag, size = 0x8, scoped, tag = 'scoped memory for tpu_custom_call.1']
    %13 = vsyncpa [#allocation3], 0
    %s14 = scalar_lea.sflag [#allocation3], 1
    %15 = vsyncpa %s14, 0
    %16 = vsyncpa [#allocation6], 0
    %s17 = scalar_lea.sflag [#allocation6], 1
    %18 = vsyncpa %s17, 0
    %19 = vsyncpa [#allocation9], 0
    %20 = vsyncpa [#allocation4], 0
    %s21 = scalar_lea.sflag [#allocation4], 1
    %22 = vsyncpa %s21, 0
    %23 = vsyncpa [#allocation12], 0
    %s24 = scalar_lea.sflag [#allocation12], 1
    %25 = vsyncpa %s24, 0
    loop: start=0, step=1, limit=4
    $region2: #{tpu_custom_call.1} parent=1 // loop_pre_header
      _
    $region3: #{tpu_custom_call.1} parent=1 // loop_header
      %s27 = sphi 0, %s31
      %p28 = scmp.ge.s32.totalorder %s27, 4
      %s34 = sphi 0, %s46
      %s35 = sphi 0, %s42
      %s36 = sphi 0, %s34
      %s37 = sphi 0, %s35
      %s38 = sphi 0, %s36
      %s39 = sphi 0, %s37
      %s51 = sphi 0, %s53
      %s54 = sphi 0, %s51
      %s55 = sphi 0, %s54
      %s71 = sphi 0, %s55
      %s79 = sphi 0, %s81
      %s82 = sphi 0, %s79
      %s83 = sphi 0, %s82
      %s99 = sphi 0, %s83
      %s103 = sphi 0, %s103
      %s105 = sphi 0, %s103
      %s106 = sphi 0, %s105
      %s120 = sphi 0, %s106
      %s124 = sphi 0, %s124
      %s126 = sphi 0, %s124
      %s127 = sphi 0, %s126
      %s141 = sphi 0, %s127
      %s145 = sphi 0, %s145
      %s147 = sphi 0, %s145
      %s148 = sphi 0, %s147
      %s162 = sphi 0, %s148
      %s166 = sphi 0, %s166
      %s168 = sphi 0, %s166
      %s169 = sphi 0, %s168
      %s183 = sphi 0, %s169
      %s191 = sphi 0, %s193
      %s194 = sphi 0, %s191
      %s195 = sphi 0, %s194
      %s211 = sphi 0, %s195
      %s219 = sphi 0, %s221
      %s222 = sphi 0, %s219
      %s223 = sphi 0, %s222
      %s239 = sphi 0, %s223
    $region4: #{tpu_custom_call.1} parent=1 // loop_header_branch
      %30 = sbr.rel (%p28) target = $region8
    $region5: #{tpu_custom_call.1} parent=1 // loop_body
      %s32 = ssub.s32 %s27, 1
      %s33 = ssub.s32 %s27, 2
      %s40 = sadd.s32 1, %s35
      %p41 = scmp.ge.s32.totalorder %s40, 1
      %s42 = scalar_select %p41, 0, %s40
      %s43 = sadd.s32 1, %s34
      %s44 = scalar_select %p41, %s43, %s34
      %p45 = scmp.ge.s32.totalorder %s44, 2
      %s46 = scalar_select %p45, 0, %s44
      %s47 = ssub.s32 %s34, %s46
      %s48 = ssub.s32 %s35, %s42
      %s49 = sor.u32 %s47, %s48
      %p50 = scmp.eq.s32.totalorder %s49, 0
      %s52 = sadd.s32 %s51, 1
      %s53 = scalar_select %p50, %s51, %s52
      %p56 = pneg %p50
      %p57 = scmp.eq.s32.totalorder %s27, 1
      %p58 = por %p56, %p57
      %p59 = scmp.ne.s32.totalorder %s51, %s54
      %p60 = scmp.eq.s32.totalorder %s27, 0
      %p61 = por %p59, %p60
      %p62 = scmp.ne.s32.totalorder %s51, %s54
      %p63 = scmp.eq.s32.totalorder %s32, 1
      %p64 = por %p62, %p63
      %p65 = scmp.ne.s32.totalorder %s54, %s55
      %p66 = scmp.eq.s32.totalorder %s32, 0
      %p67 = por %p65, %p66
      %p68 = scmp.ne.s32.totalorder %s54, %s55
      %p69 = scmp.eq.s32.totalorder %s33, 1
      %p70 = por %p68, %p69
      %p72 = scmp.ne.s32.totalorder %s55, %s71
      %p73 = scmp.eq.s32.totalorder %s33, 0
      %p74 = por %p72, %p73
      %s75 = ssub.s32 %s34, %s46
      %s76 = ssub.s32 %s35, %s42
      %s77 = sor.u32 %s75, %s76
      %p78 = scmp.eq.s32.totalorder %s77, 0
      %s80 = sadd.s32 %s79, 1
      %s81 = scalar_select %p78, %s79, %s80
      %p84 = pneg %p78
      %p85 = scmp.eq.s32.totalorder %s27, 1
      %p86 = por %p84, %p85
      %p87 = scmp.ne.s32.totalorder %s79, %s82
      %p88 = scmp.eq.s32.totalorder %s27, 0
      %p89 = por %p87, %p88
      %p90 = scmp.ne.s32.totalorder %s79, %s82
      %p91 = scmp.eq.s32.totalorder %s32, 1
      %p92 = por %p90, %p91
      %p93 = scmp.ne.s32.totalorder %s82, %s83
      %p94 = scmp.eq.s32.totalorder %s32, 0
      %p95 = por %p93, %p94
      %p96 = scmp.ne.s32.totalorder %s82, %s83
      %p97 = scmp.eq.s32.totalorder %s33, 1
      %p98 = por %p96, %p97
      %p100 = scmp.ne.s32.totalorder %s83, %s99
      %p101 = scmp.eq.s32.totalorder %s33, 0
      %p102 = por %p100, %p101
      %s104 = sadd.s32 %s103, 1
      %p107 = scmp.eq.s32.totalorder %s27, 1
      %p108 = scmp.ne.s32.totalorder %s103, %s105
      %p109 = scmp.eq.s32.totalorder %s27, 0
      %p110 = por %p108, %p109
      %p111 = scmp.ne.s32.totalorder %s103, %s105
      %p112 = scmp.eq.s32.totalorder %s32, 1
      %p113 = por %p111, %p112
      %p114 = scmp.ne.s32.totalorder %s105, %s106
      %p115 = scmp.eq.s32.totalorder %s32, 0
      %p116 = por %p114, %p115
      %p117 = scmp.ne.s32.totalorder %s105, %s106
      %p118 = scmp.eq.s32.totalorder %s33, 1
      %p119 = por %p117, %p118
      %p121 = scmp.ne.s32.totalorder %s106, %s120
      %p122 = scmp.eq.s32.totalorder %s33, 0
      %p123 = por %p121, %p122
      %s125 = sadd.s32 %s124, 1
      %p128 = scmp.eq.s32.totalorder %s27, 1
      %p129 = scmp.ne.s32.totalorder %s124, %s126
      %p130 = scmp.eq.s32.totalorder %s27, 0
      %p131 = por %p129, %p130
      %p132 = scmp.ne.s32.totalorder %s124, %s126
      %p133 = scmp.eq.s32.totalorder %s32, 1
      %p134 = por %p132, %p133
      %p135 = scmp.ne.s32.totalorder %s126, %s127
      %p136 = scmp.eq.s32.totalorder %s32, 0
      %p137 = por %p135, %p136
      %p138 = scmp.ne.s32.totalorder %s126, %s127
      %p139 = scmp.eq.s32.totalorder %s33, 1
      %p140 = por %p138, %p139
      %p142 = scmp.ne.s32.totalorder %s127, %s141
      %p143 = scmp.eq.s32.totalorder %s33, 0
      %p144 = por %p142, %p143
      %s146 = sadd.s32 %s145, 1
      %p149 = scmp.eq.s32.totalorder %s27, 1
      %p150 = scmp.ne.s32.totalorder %s145, %s147
      %p151 = scmp.eq.s32.totalorder %s27, 0
      %p152 = por %p150, %p151
      %p153 = scmp.ne.s32.totalorder %s145, %s147
      %p154 = scmp.eq.s32.totalorder %s32, 1
      %p155 = por %p153, %p154
      %p156 = scmp.ne.s32.totalorder %s147, %s148
      %p157 = scmp.eq.s32.totalorder %s32, 0
      %p158 = por %p156, %p157
      %p159 = scmp.ne.s32.totalorder %s147, %s148
      %p160 = scmp.eq.s32.totalorder %s33, 1
      %p161 = por %p159, %p160
      %p163 = scmp.ne.s32.totalorder %s148, %s162
      %p164 = scmp.eq.s32.totalorder %s33, 0
      %p165 = por %p163, %p164
      %s167 = sadd.s32 %s166, 1
      %p170 = scmp.eq.s32.totalorder %s27, 1
      %p171 = scmp.ne.s32.totalorder %s166, %s168
      %p172 = scmp.eq.s32.totalorder %s27, 0
      %p173 = por %p171, %p172
      %p174 = scmp.ne.s32.totalorder %s166, %s168
      %p175 = scmp.eq.s32.totalorder %s32, 1
      %p176 = por %p174, %p175
      %p177 = scmp.ne.s32.totalorder %s168, %s169
      %p178 = scmp.eq.s32.totalorder %s32, 0
      %p179 = por %p177, %p178
      %p180 = scmp.ne.s32.totalorder %s168, %s169
      %p181 = scmp.eq.s32.totalorder %s33, 1
      %p182 = por %p180, %p181
      %p184 = scmp.ne.s32.totalorder %s169, %s183
      %p185 = scmp.eq.s32.totalorder %s33, 0
      %p186 = por %p184, %p185
      %s187 = ssub.s32 %s34, %s46
      %s188 = ssub.s32 %s35, %s42
      %s189 = sor.u32 %s187, %s188
      %p190 = scmp.eq.s32.totalorder %s189, 0
      %s192 = sadd.s32 %s191, 1
      %s193 = scalar_select %p190, %s191, %s192
      %p196 = pneg %p190
      %p197 = scmp.eq.s32.totalorder %s27, 1
      %p198 = por %p196, %p197
      %p199 = scmp.ne.s32.totalorder %s191, %s194
      %p200 = scmp.eq.s32.totalorder %s27, 0
      %p201 = por %p199, %p200
      %p202 = scmp.ne.s32.totalorder %s191, %s194
      %p203 = scmp.eq.s32.totalorder %s32, 1
      %p204 = por %p202, %p203
      %p205 = scmp.ne.s32.totalorder %s194, %s195
      %p206 = scmp.eq.s32.totalorder %s32, 0
      %p207 = por %p205, %p206
      %p208 = scmp.ne.s32.totalorder %s194, %s195
      %p209 = scmp.eq.s32.totalorder %s33, 1
      %p210 = por %p208, %p209
      %p212 = scmp.ne.s32.totalorder %s195, %s211
      %p213 = scmp.eq.s32.totalorder %s33, 0
      %p214 = por %p212, %p213
      %s215 = ssub.s32 %s34, %s46
      %s216 = ssub.s32 %s35, %s42
      %s217 = sor.u32 %s215, %s216
      %p218 = scmp.eq.s32.totalorder %s217, 0
      %s220 = sadd.s32 %s219, 1
      %s221 = scalar_select %p218, %s219, %s220
      %p224 = pneg %p218
      %p225 = scmp.eq.s32.totalorder %s27, 1
      %p226 = por %p224, %p225
      %p227 = scmp.ne.s32.totalorder %s219, %s222
      %p228 = scmp.eq.s32.totalorder %s27, 0
      %p229 = por %p227, %p228
      %p230 = scmp.ne.s32.totalorder %s219, %s222
      %p231 = scmp.eq.s32.totalorder %s32, 1
      %p232 = por %p230, %p231
      %p233 = scmp.ne.s32.totalorder %s222, %s223
      %p234 = scmp.eq.s32.totalorder %s32, 0
      %p235 = por %p233, %p234
      %p236 = scmp.ne.s32.totalorder %s222, %s223
      %p237 = scmp.eq.s32.totalorder %s33, 1
      %p238 = por %p236, %p237
      %p240 = scmp.ne.s32.totalorder %s223, %s239
      %p241 = scmp.eq.s32.totalorder %s33, 0
      %p242 = por %p240, %p241
      %p243 = scmp.le.s32.totalorder 1, %s27
      %p244 = scmp.lt.s32.totalorder %s27, 3
      %p245 = pnand %p243, %p244
      %p246 = pneg %p245
      // Predicated region
      $region9: #{tpu_custom_call.1} parent=5 // pred_check
        _
      $region10: #{tpu_custom_call.1} parent=5 // pred_check_branch
        %248 = sbr.rel (%p245) target = $region12
      $region11: #{tpu_custom_call.1} parent=5 // pred_region
        %s249 = ssub.s32 %s27, 1
        // Predicated region
        $region13: #{tpu_custom_call.1} parent=11 // pred_check
          %p250 = pneg %p116
        $region14: #{tpu_custom_call.1} parent=11 // pred_check_branch
          %252 = sbr.rel (%p250) target = $region16
        $region15: #{tpu_custom_call.1} parent=11 // pred_region
          %254 = vsyncadd [#allocation6], 0
          %s255 = sshll.u32 %s2, 4
          %s256 = int_to_ptr.hbm [resolvable:$true] %s255
          %s257 = sshll.u32 [#allocation7], 4
          %s258 = int_to_ptr.vmem [resolvable:$true] %s257
          %263 = dma.hbm_to_vmem [thread:$0]  %s256, 4096, %s258, [#allocation6], 128, 128, 8
        $region16: #{tpu_custom_call.1} parent=11 // pred_fallthru
          _
        // Predicated region
        $region17: #{tpu_custom_call.1} parent=11 // pred_check
          %p264 = pneg %p137
        $region18: #{tpu_custom_call.1} parent=11 // pred_check_branch
          %266 = sbr.rel (%p264) target = $region20
        $region19: #{tpu_custom_call.1} parent=11 // pred_region
          _
        $region20: #{tpu_custom_call.1} parent=11 // pred_fallthru
          _
        // Predicated region
        $region21: #{tpu_custom_call.1} parent=11 // pred_check
          %p267 = pneg %p158
        $region22: #{tpu_custom_call.1} parent=11 // pred_check_branch
          %269 = sbr.rel (%p267) target = $region24
        $region23: #{tpu_custom_call.1} parent=11 // pred_region
          %271 = vsyncadd [#allocation9], 0
          %s272 = sshll.u32 %s4, 4
          %s273 = int_to_ptr.hbm [resolvable:$true] %s272
          %s274 = sshll.u32 [#allocation8], 4
          %s275 = int_to_ptr.vmem [resolvable:$true] %s274
          %280 = dma.hbm_to_vmem [thread:$0]  %s273, 4096, %s275, [#allocation9], 128, 128, 8
        $region24: #{tpu_custom_call.1} parent=11 // pred_fallthru
          _
        // Predicated region
        $region25: #{tpu_custom_call.1} parent=11 // pred_check
          %p281 = pneg %p179
        $region26: #{tpu_custom_call.1} parent=11 // pred_check_branch
          %283 = sbr.rel (%p281) target = $region28
        $region27: #{tpu_custom_call.1} parent=11 // pred_region
          _
        $region28: #{tpu_custom_call.1} parent=11 // pred_fallthru
          _
      $region12: #{tpu_custom_call.1} parent=5 // pred_fallthru
        _
      %p284 = scmp.lt.s32.totalorder %s27, 2
      // Predicated region
      $region29: #{tpu_custom_call.1} parent=5 // pred_check
        %p285 = pneg %p284
      $region30: #{tpu_custom_call.1} parent=5 // pred_check_branch
        %287 = sbr.rel (%p285) target = $region32
      $region31: #{tpu_custom_call.1} parent=5 // pred_region
        // Predicated region
        $region33: #{tpu_custom_call.1} parent=31 // pred_check
          %p288 = pneg %p61
        $region34: #{tpu_custom_call.1} parent=31 // pred_check_branch
          %290 = sbr.rel (%p288) target = $region36
        $region35: #{tpu_custom_call.1} parent=31 // pred_region
          %s291 = sand.u32 %s51, 1
          %s292 = scalar_lea.sflag [#allocation3], %s291
          %s293 = sand.u32 %s51, 1
          %s294 = smul.addr %s293, 256
          %s295 = scalar_lea.vmem [#allocation2], %s294
          %s296 = smul.u32 32, %s35
          %298 = vsyncadd %s292, 0
          %s299 = smul.addr %s296, 2
          %s300 = smul.addr %s34, 64
          %s301 = sadd.s32 %s299, %s300
          %s302 = smul.addr %s301, 4
          %s303 = scalar_lea.hbm %s0, %s302
          %s304 = sshll.u32 %s303, 4
          %s305 = int_to_ptr.hbm [resolvable:$true] %s304
          %s306 = sshll.u32 %s295, 4
          %s307 = int_to_ptr.vmem [resolvable:$true] %s306
          %312 = dma.hbm_to_vmem [thread:$0]  %s305, 4096, %s307, %s292, 128, 128, 8
        $region36: #{tpu_custom_call.1} parent=31 // pred_fallthru
          _
        // Predicated region
        $region37: #{tpu_custom_call.1} parent=31 // pred_check
          %p313 = pneg %p89
        $region38: #{tpu_custom_call.1} parent=31 // pred_check_branch
          %315 = sbr.rel (%p313) target = $region40
        $region39: #{tpu_custom_call.1} parent=31 // pred_region
          %s316 = sand.u32 %s27, 1
          %s317 = scalar_lea.sflag [#allocation6], %s316
          %s318 = sand.u32 %s79, 1
          %s319 = smul.addr %s318, 256
          %s320 = scalar_lea.vmem [#allocation5], %s319
          %s321 = smul.u32 32, %s35
          %323 = vsyncadd %s317, 0
          %s324 = smul.addr %s321, 2
          %s325 = smul.addr %s34, 64
          %s326 = sadd.s32 %s324, %s325
          %s327 = smul.addr %s326, 4
          %s328 = scalar_lea.hbm %s1, %s327
          %s329 = sshll.u32 %s328, 4
          %s330 = int_to_ptr.hbm [resolvable:$true] %s329
          %s331 = sshll.u32 %s320, 4
          %s332 = int_to_ptr.vmem [resolvable:$true] %s331
          %337 = dma.hbm_to_vmem [thread:$0]  %s330, 4096, %s332, %s317, 128, 128, 8
        $region40: #{tpu_custom_call.1} parent=31 // pred_fallthru
          _
      $region32: #{tpu_custom_call.1} parent=5 // pred_fallthru
        _
      %p338 = scmp.le.s32.totalorder 1, %s27
      %p339 = scmp.lt.s32.totalorder %s27, 3
      %p340 = pnand %p338, %p339
      %p341 = pneg %p340
      // Predicated region
      $region41: #{tpu_custom_call.1} parent=5 // pred_check
        _
      $region42: #{tpu_custom_call.1} parent=5 // pred_check_branch
        %343 = sbr.rel (%p340) target = $region44
      $region43: #{tpu_custom_call.1} parent=5 // pred_region
        %s344 = ssub.s32 %s27, 1
        %s345 = sand.u32 %s54, 1
        %s346 = scalar_lea.sflag [#allocation3], %s345
        %s347 = sand.u32 %s54, 1
        %s348 = smul.addr %s347, 256
        %s349 = scalar_lea.vmem [#allocation2], %s348
        // Predicated region
        $region45: #{tpu_custom_call.1} parent=43 // pred_check
          %p350 = pneg %p67
        $region46: #{tpu_custom_call.1} parent=43 // pred_check_branch
          %352 = sbr.rel (%p350) target = $region48
        $region47: #{tpu_custom_call.1} parent=43 // pred_region
          %354 = dma.done %s346, 4096
        $region48: #{tpu_custom_call.1} parent=43 // pred_fallthru
          _
        %s355 = sand.u32 %s32, 1
        %s356 = scalar_lea.sflag [#allocation6], %s355
        %s357 = sand.u32 %s82, 1
        %s358 = smul.addr %s357, 256
        %s359 = scalar_lea.vmem [#allocation5], %s358
        // Predicated region
        $region49: #{tpu_custom_call.1} parent=43 // pred_check
          %p360 = pneg %p95
        $region50: #{tpu_custom_call.1} parent=43 // pred_check_branch
          %362 = sbr.rel (%p360) target = $region52
        $region51: #{tpu_custom_call.1} parent=43 // pred_region
          %364 = dma.done %s356, 4096
        $region52: #{tpu_custom_call.1} parent=43 // pred_fallthru
          _
        // Predicated region
        $region53: #{tpu_custom_call.1} parent=43 // pred_check
          %p365 = pneg %p116
        $region54: #{tpu_custom_call.1} parent=43 // pred_check_branch
          %367 = sbr.rel (%p365) target = $region56
        $region55: #{tpu_custom_call.1} parent=43 // pred_region
          %369 = dma.done [#allocation6], 4096
        $region56: #{tpu_custom_call.1} parent=43 // pred_fallthru
          _
        // Predicated region
        $region57: #{tpu_custom_call.1} parent=43 // pred_check
          %p370 = pneg %p158
        $region58: #{tpu_custom_call.1} parent=43 // pred_check_branch
          %372 = sbr.rel (%p370) target = $region60
        $region59: #{tpu_custom_call.1} parent=43 // pred_region
          %374 = dma.done [#allocation9], 4096
        $region60: #{tpu_custom_call.1} parent=43 // pred_fallthru
          _
        %s375 = sand.u32 %s54, 1
        %s376 = scalar_lea.sflag [#allocation3], %s375
        %s377 = sand.u32 %s54, 1
        %s378 = smul.addr %s377, 256
        %s379 = scalar_lea.vmem [#allocation2], %s378
        %p380 = pneg %p67
        %p381 = pneg %p64
        %s382 = sand.u32 %s32, 1
        %s383 = scalar_lea.sflag [#allocation6], %s382
        %s384 = sand.u32 %s82, 1
        %s385 = smul.addr %s384, 256
        %s386 = scalar_lea.vmem [#allocation5], %s385
        %p387 = pneg %p95
        %p388 = pneg %p92
        %p389 = pneg %p116
        %p390 = pneg %p113
        %p391 = pneg %p137
        %p392 = pneg %p134
        %p393 = pneg %p158
        %p394 = pneg %p155
        %p395 = pneg %p179
        %p396 = pneg %p176
        %p397 = pneg %p207
        %p398 = pneg %p204
        %s399 = sand.u32 %s194, 1
        %s400 = scalar_lea.sflag [#allocation4], %s399
        %s401 = sand.u32 %s194, 1
        %s402 = smul.addr %s401, 256
        %s403 = scalar_lea.vmem [#allocation10], %s402
        %p404 = pneg %p235
        %p405 = pneg %p232
        %s406 = sand.u32 %s222, 1
        %s407 = scalar_lea.sflag [#allocation12], %s406
        %s408 = sand.u32 %s222, 1
        %s409 = smul.addr %s408, 256
        %s410 = scalar_lea.vmem [#allocation11], %s409
        %s411 = smul.u32 32, %s37
        %s412 = smul.u32 32, %s37
        %s413 = smul.u32 32, %s37
        %s414 = smul.u32 32, %s37
        %v415 = vld [vmem:[%s349] sm:$0xff]
        %v416 = vld [vmem:[%s349 + $0x8] sm:$0xff]
        %v417 = vld [vmem:[%s349 + $0x10] sm:$0xff]
        %v418 = vld [vmem:[%s349 + $0x18] sm:$0xff]
        %v419 = vld [vmem:[%s349 + $0x20] sm:$0xff]
        %v420 = vld [vmem:[%s349 + $0x28] sm:$0xff]
        %v421 = vld [vmem:[%s349 + $0x30] sm:$0xff]
        %v422 = vld [vmem:[%s349 + $0x38] sm:$0xff]
        %v423 = vld [vmem:[%s349 + $0x40] sm:$0xff]
        %v424 = vld [vmem:[%s349 + $0x48] sm:$0xff]
        %v425 = vld [vmem:[%s349 + $0x50] sm:$0xff]
        %v426 = vld [vmem:[%s349 + $0x58] sm:$0xff]
        %v427 = vld [vmem:[%s349 + $0x60] sm:$0xff]
        %v428 = vld [vmem:[%s349 + $0x68] sm:$0xff]
        %v429 = vld [vmem:[%s349 + $0x70] sm:$0xff]
        %v430 = vld [vmem:[%s349 + $0x78] sm:$0xff]
        %v431 = vld [vmem:[%s349 + $0x80] sm:$0xff]
        %v432 = vld [vmem:[%s349 + $0x88] sm:$0xff]
        %v433 = vld [vmem:[%s349 + $0x90] sm:$0xff]
        %v434 = vld [vmem:[%s349 + $0x98] sm:$0xff]
        %v435 = vld [vmem:[%s349 + $0xa0] sm:$0xff]
        %v436 = vld [vmem:[%s349 + $0xa8] sm:$0xff]
        %v437 = vld [vmem:[%s349 + $0xb0] sm:$0xff]
        %v438 = vld [vmem:[%s349 + $0xb8] sm:$0xff]
        %v439 = vld [vmem:[%s349 + $0xc0] sm:$0xff]
        %v440 = vld [vmem:[%s349 + $0xc8] sm:$0xff]
        %v441 = vld [vmem:[%s349 + $0xd0] sm:$0xff]
        %v442 = vld [vmem:[%s349 + $0xd8] sm:$0xff]
        %v443 = vld [vmem:[%s349 + $0xe0] sm:$0xff]
        %v444 = vld [vmem:[%s349 + $0xe8] sm:$0xff]
        %v445 = vld [vmem:[%s349 + $0xf0] sm:$0xff]
        %v446 = vld [vmem:[%s349 + $0xf8] sm:$0xff]
        %v447 = vld [vmem:[#allocation7] sm:$0xff]
        %v448 = vld [vmem:[#allocation7 + $0x8] sm:$0xff]
        %v449 = vld [vmem:[#allocation7 + $0x10] sm:$0xff]
        %v450 = vld [vmem:[#allocation7 + $0x18] sm:$0xff]
        %v451 = vld [vmem:[#allocation7 + $0x20] sm:$0xff]
        %v452 = vld [vmem:[#allocation7 + $0x28] sm:$0xff]
        %v453 = vld [vmem:[#allocation7 + $0x30] sm:$0xff]
        %v454 = vld [vmem:[#allocation7 + $0x38] sm:$0xff]
        %v455 = vld [vmem:[#allocation7 + $0x40] sm:$0xff]
        %v456 = vld [vmem:[#allocation7 + $0x48] sm:$0xff]
        %v457 = vld [vmem:[#allocation7 + $0x50] sm:$0xff]
        %v458 = vld [vmem:[#allocation7 + $0x58] sm:$0xff]
        %v459 = vld [vmem:[#allocation7 + $0x60] sm:$0xff]
        %v460 = vld [vmem:[#allocation7 + $0x68] sm:$0xff]
        %v461 = vld [vmem:[#allocation7 + $0x70] sm:$0xff]
        %v462 = vld [vmem:[#allocation7 + $0x78] sm:$0xff]
        %v463 = vld [vmem:[#allocation7 + $0x80] sm:$0xff]
        %v464 = vld [vmem:[#allocation7 + $0x88] sm:$0xff]
        %v465 = vld [vmem:[#allocation7 + $0x90] sm:$0xff]
        %v466 = vld [vmem:[#allocation7 + $0x98] sm:$0xff]
        %v467 = vld [vmem:[#allocation7 + $0xa0] sm:$0xff]
        %v468 = vld [vmem:[#allocation7 + $0xa8] sm:$0xff]
        %v469 = vld [vmem:[#allocation7 + $0xb0] sm:$0xff]
        %v470 = vld [vmem:[#allocation7 + $0xb8] sm:$0xff]
        %v471 = vld [vmem:[#allocation7 + $0xc0] sm:$0xff]
        %v472 = vld [vmem:[#allocation7 + $0xc8] sm:$0xff]
        %v473 = vld [vmem:[#allocation7 + $0xd0] sm:$0xff]
        %v474 = vld [vmem:[#allocation7 + $0xd8] sm:$0xff]
        %v475 = vld [vmem:[#allocation7 + $0xe0] sm:$0xff]
        %v476 = vld [vmem:[#allocation7 + $0xe8] sm:$0xff]
        %v477 = vld [vmem:[#allocation7 + $0xf0] sm:$0xff]
        %v478 = vld [vmem:[#allocation7 + $0xf8] sm:$0xff]
        %v479 = vld [vmem:[%s3] sm:$0x3]
        %v481 = vperm.slane %v479, 0
        %v482 = vperm.slane %v479, 1
        %v517 = vunpack.c.l.b16 %v415
        %v518 = vunpack.c.h.b16 %v415
        %v519 = vunpack.c.l.b16 %v416
        %v520 = vunpack.c.h.b16 %v416
        %v521 = vunpack.c.l.b16 %v417
        %v522 = vunpack.c.h.b16 %v417
        %v523 = vunpack.c.l.b16 %v418
        %v524 = vunpack.c.h.b16 %v418
        %v525 = vunpack.c.l.b16 %v419
        %v526 = vunpack.c.h.b16 %v419
        %v527 = vunpack.c.l.b16 %v420
        %v528 = vunpack.c.h.b16 %v420
        %v529 = vunpack.c.l.b16 %v421
        %v530 = vunpack.c.h.b16 %v421
        %v531 = vunpack.c.l.b16 %v422
        %v532 = vunpack.c.h.b16 %v422
        %v533 = vunpack.c.l.b16 %v423
        %v534 = vunpack.c.h.b16 %v423
        %v535 = vunpack.c.l.b16 %v424
        %v536 = vunpack.c.h.b16 %v424
        %v537 = vunpack.c.l.b16 %v425
        %v538 = vunpack.c.h.b16 %v425
        %v539 = vunpack.c.l.b16 %v426
        %v540 = vunpack.c.h.b16 %v426
        %v541 = vunpack.c.l.b16 %v427
        %v542 = vunpack.c.h.b16 %v427
        %v543 = vunpack.c.l.b16 %v428
        %v544 = vunpack.c.h.b16 %v428
        %v545 = vunpack.c.l.b16 %v429
        %v546 = vunpack.c.h.b16 %v429
        %v547 = vunpack.c.l.b16 %v430
        %v548 = vunpack.c.h.b16 %v430
        %v549 = vunpack.c.l.b16 %v431
        %v550 = vunpack.c.h.b16 %v431
        %v551 = vunpack.c.l.b16 %v432
        %v552 = vunpack.c.h.b16 %v432
        %v553 = vunpack.c.l.b16 %v433
        %v554 = vunpack.c.h.b16 %v433
        %v555 = vunpack.c.l.b16 %v434
        %v556 = vunpack.c.h.b16 %v434
        %v557 = vunpack.c.l.b16 %v435
        %v558 = vunpack.c.h.b16 %v435
        %v559 = vunpack.c.l.b16 %v436
        %v560 = vunpack.c.h.b16 %v436
        %v561 = vunpack.c.l.b16 %v437
        %v562 = vunpack.c.h.b16 %v437
        %v563 = vunpack.c.l.b16 %v438
        %v564 = vunpack.c.h.b16 %v438
        %v565 = vunpack.c.l.b16 %v439
        %v566 = vunpack.c.h.b16 %v439
        %v567 = vunpack.c.l.b16 %v440
        %v568 = vunpack.c.h.b16 %v440
        %v569 = vunpack.c.l.b16 %v441
        %v570 = vunpack.c.h.b16 %v441
        %v571 = vunpack.c.l.b16 %v442
        %v572 = vunpack.c.h.b16 %v442
        %v573 = vunpack.c.l.b16 %v443
        %v574 = vunpack.c.h.b16 %v443
        %v575 = vunpack.c.l.b16 %v444
        %v576 = vunpack.c.h.b16 %v444
        %v577 = vunpack.c.l.b16 %v445
        %v578 = vunpack.c.h.b16 %v445
        %v579 = vunpack.c.l.b16 %v446
        %v580 = vunpack.c.h.b16 %v446
        %v581 = vpack.c.b16 %v519, %v517
        %v582 = vpack.c.b16 %v520, %v518
        %v583 = vpack.c.b16 %v523, %v521
        %v584 = vpack.c.b16 %v524, %v522
        %v585 = vpack.c.b16 %v527, %v525
        %v586 = vpack.c.b16 %v528, %v526
        %v587 = vpack.c.b16 %v531, %v529
        %v588 = vpack.c.b16 %v532, %v530
        %v589 = vpack.c.b16 %v535, %v533
        %v590 = vpack.c.b16 %v536, %v534
        %v591 = vpack.c.b16 %v539, %v537
        %v592 = vpack.c.b16 %v540, %v538
        %v593 = vpack.c.b16 %v543, %v541
        %v594 = vpack.c.b16 %v544, %v542
        %v595 = vpack.c.b16 %v547, %v545
        %v596 = vpack.c.b16 %v548, %v546
        %v597 = vpack.c.b16 %v551, %v549
        %v598 = vpack.c.b16 %v552, %v550
        %v599 = vpack.c.b16 %v555, %v553
        %v600 = vpack.c.b16 %v556, %v554
        %v601 = vpack.c.b16 %v559, %v557
        %v602 = vpack.c.b16 %v560, %v558
        %v603 = vpack.c.b16 %v563, %v561
        %v604 = vpack.c.b16 %v564, %v562
        %v605 = vpack.c.b16 %v567, %v565
        %v606 = vpack.c.b16 %v568, %v566
        %v607 = vpack.c.b16 %v571, %v569
        %v608 = vpack.c.b16 %v572, %v570
        %v609 = vpack.c.b16 %v575, %v573
        %v610 = vpack.c.b16 %v576, %v574
        %v611 = vpack.c.b16 %v579, %v577
        %v612 = vpack.c.b16 %v580, %v578
        %v677 = vunpack.c.l.b16 %v447
        %v678 = vunpack.c.h.b16 %v447
        %v679 = vunpack.c.l.b16 %v448
        %v680 = vunpack.c.h.b16 %v448
        %v681 = vunpack.c.l.b16 %v449
        %v682 = vunpack.c.h.b16 %v449
        %v683 = vunpack.c.l.b16 %v450
        %v684 = vunpack.c.h.b16 %v450
        %v685 = vunpack.c.l.b16 %v451
        %v686 = vunpack.c.h.b16 %v451
        %v687 = vunpack.c.l.b16 %v452
        %v688 = vunpack.c.h.b16 %v452
        %v689 = vunpack.c.l.b16 %v453
        %v690 = vunpack.c.h.b16 %v453
        %v691 = vunpack.c.l.b16 %v454
        %v692 = vunpack.c.h.b16 %v454
        %v693 = vunpack.c.l.b16 %v455
        %v694 = vunpack.c.h.b16 %v455
        %v695 = vunpack.c.l.b16 %v456
        %v696 = vunpack.c.h.b16 %v456
        %v697 = vunpack.c.l.b16 %v457
        %v698 = vunpack.c.h.b16 %v457
        %v699 = vunpack.c.l.b16 %v458
        %v700 = vunpack.c.h.b16 %v458
        %v701 = vunpack.c.l.b16 %v459
        %v702 = vunpack.c.h.b16 %v459
        %v703 = vunpack.c.l.b16 %v460
        %v704 = vunpack.c.h.b16 %v460
        %v705 = vunpack.c.l.b16 %v461
        %v706 = vunpack.c.h.b16 %v461
        %v707 = vunpack.c.l.b16 %v462
        %v708 = vunpack.c.h.b16 %v462
        %v709 = vunpack.c.l.b16 %v463
        %v710 = vunpack.c.h.b16 %v463
        %v711 = vunpack.c.l.b16 %v464
        %v712 = vunpack.c.h.b16 %v464
        %v713 = vunpack.c.l.b16 %v465
        %v714 = vunpack.c.h.b16 %v465
        %v715 = vunpack.c.l.b16 %v466
        %v716 = vunpack.c.h.b16 %v466
        %v717 = vunpack.c.l.b16 %v467
        %v718 = vunpack.c.h.b16 %v467
        %v719 = vunpack.c.l.b16 %v468
        %v720 = vunpack.c.h.b16 %v468
        %v721 = vunpack.c.l.b16 %v469
        %v722 = vunpack.c.h.b16 %v469
        %v723 = vunpack.c.l.b16 %v470
        %v724 = vunpack.c.h.b16 %v470
        %v725 = vunpack.c.l.b16 %v471
        %v726 = vunpack.c.h.b16 %v471
        %v727 = vunpack.c.l.b16 %v472
        %v728 = vunpack.c.h.b16 %v472
        %v729 = vunpack.c.l.b16 %v473
        %v730 = vunpack.c.h.b16 %v473
        %v731 = vunpack.c.l.b16 %v474
        %v732 = vunpack.c.h.b16 %v474
        %v733 = vunpack.c.l.b16 %v475
        %v734 = vunpack.c.h.b16 %v475
        %v735 = vunpack.c.l.b16 %v476
        %v736 = vunpack.c.h.b16 %v476
        %v737 = vunpack.c.l.b16 %v477
        %v738 = vunpack.c.h.b16 %v477
        %v739 = vunpack.c.l.b16 %v478
        %v740 = vunpack.c.h.b16 %v478
        %v741 = vpack.c.b16 %v679, %v677
        %v742 = vpack.c.b16 %v680, %v678
        %v743 = vpack.c.b16 %v683, %v681
        %v744 = vpack.c.b16 %v684, %v682
        %v745 = vpack.c.b16 %v687, %v685
        %v746 = vpack.c.b16 %v688, %v686
        %v747 = vpack.c.b16 %v691, %v689
        %v748 = vpack.c.b16 %v692, %v690
        %v749 = vpack.c.b16 %v695, %v693
        %v750 = vpack.c.b16 %v696, %v694
        %v751 = vpack.c.b16 %v699, %v697
        %v752 = vpack.c.b16 %v700, %v698
        %v753 = vpack.c.b16 %v703, %v701
        %v754 = vpack.c.b16 %v704, %v702
        %v755 = vpack.c.b16 %v707, %v705
        %v756 = vpack.c.b16 %v708, %v706
        %v757 = vpack.c.b16 %v711, %v709
        %v758 = vpack.c.b16 %v712, %v710
        %v759 = vpack.c.b16 %v715, %v713
        %v760 = vpack.c.b16 %v716, %v714
        %v761 = vpack.c.b16 %v719, %v717
        %v762 = vpack.c.b16 %v720, %v718
        %v763 = vpack.c.b16 %v723, %v721
        %v764 = vpack.c.b16 %v724, %v722
        %v765 = vpack.c.b16 %v727, %v725
        %v766 = vpack.c.b16 %v728, %v726
        %v767 = vpack.c.b16 %v731, %v729
        %v768 = vpack.c.b16 %v732, %v730
        %v769 = vpack.c.b16 %v735, %v733
        %v770 = vpack.c.b16 %v736, %v734
        %v771 = vpack.c.b16 %v739, %v737
        %v772 = vpack.c.b16 %v740, %v738
        %805 = vmatpush.bf16.msra.mxu0 %v755
        %806 = vmatpush.bf16.msra.mxu0 %v753
        %807 = vmatpush.bf16.msra.mxu0 %v751
        %808 = vmatpush.bf16.msra.mxu0 %v749
        %809 = vmatpush.bf16.msra.mxu0 %v747
        %810 = vmatpush.bf16.msra.mxu0 %v745
        %811 = vmatpush.bf16.msra.mxu0 %v743
        %812 = vmatpush.bf16.msra.mxu0 %v741
        %813 = vmatmul.bf16.gmra.mxu0 %v581
        %v814 = vpop.f32.mrf.mxu0
        %v815 = vadd.f32 %v481, %v814
        %v816 = vpop.f32.mrf.mxu0
        %v817 = vadd.f32 %v481, %v816
        %818 = vmatmul.bf16.gmra.mxu0 %v583
        %v819 = vpop.f32.mrf.mxu0
        %v820 = vadd.f32 %v481, %v819
        %v821 = vpop.f32.mrf.mxu0
        %v822 = vadd.f32 %v481, %v821
        %823 = vmatmul.bf16.gmra.mxu0 %v585
        %v824 = vpop.f32.mrf.mxu0
        %v825 = vadd.f32 %v481, %v824
        %v826 = vpop.f32.mrf.mxu0
        %v827 = vadd.f32 %v481, %v826
        %828 = vmatmul.bf16.gmra.mxu0 %v587
        %v829 = vpop.f32.mrf.mxu0
        %v830 = vadd.f32 %v481, %v829
        %v831 = vpop.f32.mrf.mxu0
        %v832 = vadd.f32 %v481, %v831
        %833 = vmatmul.bf16.gmra.mxu0 %v589
        %v834 = vpop.f32.mrf.mxu0
        %v835 = vadd.f32 %v481, %v834
        %v836 = vpop.f32.mrf.mxu0
        %v837 = vadd.f32 %v481, %v836
        %838 = vmatmul.bf16.gmra.mxu0 %v591
        %v839 = vpop.f32.mrf.mxu0
        %v840 = vadd.f32 %v481, %v839
        %v841 = vpop.f32.mrf.mxu0
        %v842 = vadd.f32 %v481, %v841
        %843 = vmatmul.bf16.gmra.mxu0 %v593
        %v844 = vpop.f32.mrf.mxu0
        %v845 = vadd.f32 %v481, %v844
        %v846 = vpop.f32.mrf.mxu0
        %v847 = vadd.f32 %v481, %v846
        %848 = vmatmul.bf16.gmra.mxu0 %v595
        %v849 = vpop.f32.mrf.mxu0
        %v850 = vadd.f32 %v481, %v849
        %v851 = vpop.f32.mrf.mxu0
        %v852 = vadd.f32 %v481, %v851
        %853 = vmatmul.bf16.gmra.mxu0 %v597
        %v854 = vpop.f32.mrf.mxu0
        %v855 = vadd.f32 %v481, %v854
        %v856 = vpop.f32.mrf.mxu0
        %v857 = vadd.f32 %v481, %v856
        %858 = vmatmul.bf16.gmra.mxu0 %v599
        %v859 = vpop.f32.mrf.mxu0
        %v860 = vadd.f32 %v481, %v859
        %v861 = vpop.f32.mrf.mxu0
        %v862 = vadd.f32 %v481, %v861
        %863 = vmatmul.bf16.gmra.mxu0 %v601
        %v864 = vpop.f32.mrf.mxu0
        %v865 = vadd.f32 %v481, %v864
        %v866 = vpop.f32.mrf.mxu0
        %v867 = vadd.f32 %v481, %v866
        %868 = vmatmul.bf16.gmra.mxu0 %v603
        %v869 = vpop.f32.mrf.mxu0
        %v870 = vadd.f32 %v481, %v869
        %v871 = vpop.f32.mrf.mxu0
        %v872 = vadd.f32 %v481, %v871
        %873 = vmatmul.bf16.gmra.mxu0 %v605
        %v874 = vpop.f32.mrf.mxu0
        %v875 = vadd.f32 %v481, %v874
        %v876 = vpop.f32.mrf.mxu0
        %v877 = vadd.f32 %v481, %v876
        %878 = vmatmul.bf16.gmra.mxu0 %v607
        %v879 = vpop.f32.mrf.mxu0
        %v880 = vadd.f32 %v481, %v879
        %v881 = vpop.f32.mrf.mxu0
        %v882 = vadd.f32 %v481, %v881
        %883 = vmatmul.bf16.gmra.mxu0 %v609
        %v884 = vpop.f32.mrf.mxu0
        %v885 = vadd.f32 %v481, %v884
        %v886 = vpop.f32.mrf.mxu0
        %v887 = vadd.f32 %v481, %v886
        %888 = vmatmul.bf16.gmra.mxu0 %v611
        %v889 = vpop.f32.mrf.mxu0
        %v890 = vadd.f32 %v481, %v889
        %v891 = vpop.f32.mrf.mxu0
        %v892 = vadd.f32 %v481, %v891
        %893 = vdwg.mxu0
        %894 = vmatpush.bf16.msra.mxu0 %v771
        %895 = vmatpush.bf16.msra.mxu0 %v769
        %896 = vmatpush.bf16.msra.mxu0 %v767
        %897 = vmatpush.bf16.msra.mxu0 %v765
        %898 = vmatpush.bf16.msra.mxu0 %v763
        %899 = vmatpush.bf16.msra.mxu0 %v761
        %900 = vmatpush.bf16.msra.mxu0 %v759
        %901 = vmatpush.bf16.msra.mxu0 %v757
        %902 = vmatmul.bf16.gmra.mxu0 %v582
        %v903 = vpop.f32.mrf.mxu0
        %v904 = vadd.f32 %v815, %v903
        %v905 = vpop.f32.mrf.mxu0
        %v906 = vadd.f32 %v817, %v905
        %907 = vmatmul.bf16.gmra.mxu0 %v584
        %v908 = vpop.f32.mrf.mxu0
        %v909 = vadd.f32 %v820, %v908
        %v910 = vpop.f32.mrf.mxu0
        %v911 = vadd.f32 %v822, %v910
        %912 = vmatmul.bf16.gmra.mxu0 %v586
        %v913 = vpop.f32.mrf.mxu0
        %v914 = vadd.f32 %v825, %v913
        %v915 = vpop.f32.mrf.mxu0
        %v916 = vadd.f32 %v827, %v915
        %917 = vmatmul.bf16.gmra.mxu0 %v588
        %v918 = vpop.f32.mrf.mxu0
        %v919 = vadd.f32 %v830, %v918
        %v920 = vpop.f32.mrf.mxu0
        %v921 = vadd.f32 %v832, %v920
        %922 = vmatmul.bf16.gmra.mxu0 %v590
        %v923 = vpop.f32.mrf.mxu0
        %v924 = vadd.f32 %v835, %v923
        %v925 = vpop.f32.mrf.mxu0
        %v926 = vadd.f32 %v837, %v925
        %927 = vmatmul.bf16.gmra.mxu0 %v592
        %v928 = vpop.f32.mrf.mxu0
        %v929 = vadd.f32 %v840, %v928
        %v930 = vpop.f32.mrf.mxu0
        %v931 = vadd.f32 %v842, %v930
        %932 = vmatmul.bf16.gmra.mxu0 %v594
        %v933 = vpop.f32.mrf.mxu0
        %v934 = vadd.f32 %v845, %v933
        %v935 = vpop.f32.mrf.mxu0
        %v936 = vadd.f32 %v847, %v935
        %937 = vmatmul.bf16.gmra.mxu0 %v596
        %v938 = vpop.f32.mrf.mxu0
        %v939 = vadd.f32 %v850, %v938
        %v940 = vpop.f32.mrf.mxu0
        %v941 = vadd.f32 %v852, %v940
        %942 = vmatmul.bf16.gmra.mxu0 %v598
        %v943 = vpop.f32.mrf.mxu0
        %v944 = vadd.f32 %v855, %v943
        %v945 = vpop.f32.mrf.mxu0
        %v946 = vadd.f32 %v857, %v945
        %947 = vmatmul.bf16.gmra.mxu0 %v600
        %v948 = vpop.f32.mrf.mxu0
        %v949 = vadd.f32 %v860, %v948
        %v950 = vpop.f32.mrf.mxu0
        %v951 = vadd.f32 %v862, %v950
        %952 = vmatmul.bf16.gmra.mxu0 %v602
        %v953 = vpop.f32.mrf.mxu0
        %v954 = vadd.f32 %v865, %v953
        %v955 = vpop.f32.mrf.mxu0
        %v956 = vadd.f32 %v867, %v955
        %957 = vmatmul.bf16.gmra.mxu0 %v604
        %v958 = vpop.f32.mrf.mxu0
        %v959 = vadd.f32 %v870, %v958
        %v960 = vpop.f32.mrf.mxu0
        %v961 = vadd.f32 %v872, %v960
        %962 = vmatmul.bf16.gmra.mxu0 %v606
        %v963 = vpop.f32.mrf.mxu0
        %v964 = vadd.f32 %v875, %v963
        %v965 = vpop.f32.mrf.mxu0
        %v966 = vadd.f32 %v877, %v965
        %967 = vmatmul.bf16.gmra.mxu0 %v608
        %v968 = vpop.f32.mrf.mxu0
        %v969 = vadd.f32 %v880, %v968
        %v970 = vpop.f32.mrf.mxu0
        %v971 = vadd.f32 %v882, %v970
        %972 = vmatmul.bf16.gmra.mxu0 %v610
        %v973 = vpop.f32.mrf.mxu0
        %v974 = vadd.f32 %v885, %v973
        %v975 = vpop.f32.mrf.mxu0
        %v976 = vadd.f32 %v887, %v975
        %977 = vmatmul.bf16.gmra.mxu0 %v612
        %v978 = vpop.f32.mrf.mxu0
        %v979 = vadd.f32 %v890, %v978
        %v980 = vpop.f32.mrf.mxu0
        %v981 = vadd.f32 %v892, %v980
        %982 = vdwg.mxu0
        %983 = vmatpush.bf16.msra.mxu0 %v756
        %984 = vmatpush.bf16.msra.mxu0 %v754
        %985 = vmatpush.bf16.msra.mxu0 %v752
        %986 = vmatpush.bf16.msra.mxu0 %v750
        %987 = vmatpush.bf16.msra.mxu0 %v748
        %988 = vmatpush.bf16.msra.mxu0 %v746
        %989 = vmatpush.bf16.msra.mxu0 %v744
        %990 = vmatpush.bf16.msra.mxu0 %v742
        %991 = vmatmul.bf16.gmra.mxu0 %v581
        %v992 = vpop.f32.mrf.mxu0
        %v993 = vadd.f32 %v482, %v992
        %v994 = vpop.f32.mrf.mxu0
        %v995 = vadd.f32 %v482, %v994
        %996 = vmatmul.bf16.gmra.mxu0 %v583
        %v997 = vpop.f32.mrf.mxu0
        %v998 = vadd.f32 %v482, %v997
        %v999 = vpop.f32.mrf.mxu0
        %v1000 = vadd.f32 %v482, %v999
        %1001 = vmatmul.bf16.gmra.mxu0 %v585
        %v1002 = vpop.f32.mrf.mxu0
        %v1003 = vadd.f32 %v482, %v1002
        %v1004 = vpop.f32.mrf.mxu0
        %v1005 = vadd.f32 %v482, %v1004
        %1006 = vmatmul.bf16.gmra.mxu0 %v587
        %v1007 = vpop.f32.mrf.mxu0
        %v1008 = vadd.f32 %v482, %v1007
        %v1009 = vpop.f32.mrf.mxu0
        %v1010 = vadd.f32 %v482, %v1009
        %1011 = vmatmul.bf16.gmra.mxu0 %v589
        %v1012 = vpop.f32.mrf.mxu0
        %v1013 = vadd.f32 %v482, %v1012
        %v1014 = vpop.f32.mrf.mxu0
        %v1015 = vadd.f32 %v482, %v1014
        %1016 = vmatmul.bf16.gmra.mxu0 %v591
        %v1017 = vpop.f32.mrf.mxu0
        %v1018 = vadd.f32 %v482, %v1017
        %v1019 = vpop.f32.mrf.mxu0
        %v1020 = vadd.f32 %v482, %v1019
        %1021 = vmatmul.bf16.gmra.mxu0 %v593
        %v1022 = vpop.f32.mrf.mxu0
        %v1023 = vadd.f32 %v482, %v1022
        %v1024 = vpop.f32.mrf.mxu0
        %v1025 = vadd.f32 %v482, %v1024
        %1026 = vmatmul.bf16.gmra.mxu0 %v595
        %v1027 = vpop.f32.mrf.mxu0
        %v1028 = vadd.f32 %v482, %v1027
        %v1029 = vpop.f32.mrf.mxu0
        %v1030 = vadd.f32 %v482, %v1029
        %1031 = vmatmul.bf16.gmra.mxu0 %v597
        %v1032 = vpop.f32.mrf.mxu0
        %v1033 = vadd.f32 %v482, %v1032
        %v1034 = vpop.f32.mrf.mxu0
        %v1035 = vadd.f32 %v482, %v1034
        %1036 = vmatmul.bf16.gmra.mxu0 %v599
        %v1037 = vpop.f32.mrf.mxu0
        %v1038 = vadd.f32 %v482, %v1037
        %v1039 = vpop.f32.mrf.mxu0
        %v1040 = vadd.f32 %v482, %v1039
        %1041 = vmatmul.bf16.gmra.mxu0 %v601
        %v1042 = vpop.f32.mrf.mxu0
        %v1043 = vadd.f32 %v482, %v1042
        %v1044 = vpop.f32.mrf.mxu0
        %v1045 = vadd.f32 %v482, %v1044
        %1046 = vmatmul.bf16.gmra.mxu0 %v603
        %v1047 = vpop.f32.mrf.mxu0
        %v1048 = vadd.f32 %v482, %v1047
        %v1049 = vpop.f32.mrf.mxu0
        %v1050 = vadd.f32 %v482, %v1049
        %1051 = vmatmul.bf16.gmra.mxu0 %v605
        %v1052 = vpop.f32.mrf.mxu0
        %v1053 = vadd.f32 %v482, %v1052
        %v1054 = vpop.f32.mrf.mxu0
        %v1055 = vadd.f32 %v482, %v1054
        %1056 = vmatmul.bf16.gmra.mxu0 %v607
        %v1057 = vpop.f32.mrf.mxu0
        %v1058 = vadd.f32 %v482, %v1057
        %v1059 = vpop.f32.mrf.mxu0
        %v1060 = vadd.f32 %v482, %v1059
        %1061 = vmatmul.bf16.gmra.mxu0 %v609
        %v1062 = vpop.f32.mrf.mxu0
        %v1063 = vadd.f32 %v482, %v1062
        %v1064 = vpop.f32.mrf.mxu0
        %v1065 = vadd.f32 %v482, %v1064
        %1066 = vmatmul.bf16.gmra.mxu0 %v611
        %v1067 = vpop.f32.mrf.mxu0
        %v1068 = vadd.f32 %v482, %v1067
        %v1069 = vpop.f32.mrf.mxu0
        %v1070 = vadd.f32 %v482, %v1069
        %1071 = vdwg.mxu0
        %1072 = vmatpush.bf16.msra.mxu0 %v772
        %1073 = vmatpush.bf16.msra.mxu0 %v770
        %1074 = vmatpush.bf16.msra.mxu0 %v768
        %1075 = vmatpush.bf16.msra.mxu0 %v766
        %1076 = vmatpush.bf16.msra.mxu0 %v764
        %1077 = vmatpush.bf16.msra.mxu0 %v762
        %1078 = vmatpush.bf16.msra.mxu0 %v760
        %1079 = vmatpush.bf16.msra.mxu0 %v758
        %1080 = vmatmul.bf16.gmra.mxu0 %v582
        %v1081 = vpop.f32.mrf.mxu0
        %v1082 = vadd.f32 %v993, %v1081
        %v1083 = vpop.f32.mrf.mxu0
        %v1084 = vadd.f32 %v995, %v1083
        %1085 = vmatmul.bf16.gmra.mxu0 %v584
        %v1086 = vpop.f32.mrf.mxu0
        %v1087 = vadd.f32 %v998, %v1086
        %v1088 = vpop.f32.mrf.mxu0
        %v1089 = vadd.f32 %v1000, %v1088
        %1090 = vmatmul.bf16.gmra.mxu0 %v586
        %v1091 = vpop.f32.mrf.mxu0
        %v1092 = vadd.f32 %v1003, %v1091
        %v1093 = vpop.f32.mrf.mxu0
        %v1094 = vadd.f32 %v1005, %v1093
        %1095 = vmatmul.bf16.gmra.mxu0 %v588
        %v1096 = vpop.f32.mrf.mxu0
        %v1097 = vadd.f32 %v1008, %v1096
        %v1098 = vpop.f32.mrf.mxu0
        %v1099 = vadd.f32 %v1010, %v1098
        %1100 = vmatmul.bf16.gmra.mxu0 %v590
        %v1101 = vpop.f32.mrf.mxu0
        %v1102 = vadd.f32 %v1013, %v1101
        %v1103 = vpop.f32.mrf.mxu0
        %v1104 = vadd.f32 %v1015, %v1103
        %1105 = vmatmul.bf16.gmra.mxu0 %v592
        %v1106 = vpop.f32.mrf.mxu0
        %v1107 = vadd.f32 %v1018, %v1106
        %v1108 = vpop.f32.mrf.mxu0
        %v1109 = vadd.f32 %v1020, %v1108
        %1110 = vmatmul.bf16.gmra.mxu0 %v594
        %v1111 = vpop.f32.mrf.mxu0
        %v1112 = vadd.f32 %v1023, %v1111
        %v1113 = vpop.f32.mrf.mxu0
        %v1114 = vadd.f32 %v1025, %v1113
        %1115 = vmatmul.bf16.gmra.mxu0 %v596
        %v1116 = vpop.f32.mrf.mxu0
        %v1117 = vadd.f32 %v1028, %v1116
        %v1118 = vpop.f32.mrf.mxu0
        %v1119 = vadd.f32 %v1030, %v1118
        %1120 = vmatmul.bf16.gmra.mxu0 %v598
        %v1121 = vpop.f32.mrf.mxu0
        %v1122 = vadd.f32 %v1033, %v1121
        %v1123 = vpop.f32.mrf.mxu0
        %v1124 = vadd.f32 %v1035, %v1123
        %1125 = vmatmul.bf16.gmra.mxu0 %v600
        %v1126 = vpop.f32.mrf.mxu0
        %v1127 = vadd.f32 %v1038, %v1126
        %v1128 = vpop.f32.mrf.mxu0
        %v1129 = vadd.f32 %v1040, %v1128
        %1130 = vmatmul.bf16.gmra.mxu0 %v602
        %v1131 = vpop.f32.mrf.mxu0
        %v1132 = vadd.f32 %v1043, %v1131
        %v1133 = vpop.f32.mrf.mxu0
        %v1134 = vadd.f32 %v1045, %v1133
        %1135 = vmatmul.bf16.gmra.mxu0 %v604
        %v1136 = vpop.f32.mrf.mxu0
        %v1137 = vadd.f32 %v1048, %v1136
        %v1138 = vpop.f32.mrf.mxu0
        %v1139 = vadd.f32 %v1050, %v1138
        %1140 = vmatmul.bf16.gmra.mxu0 %v606
        %v1141 = vpop.f32.mrf.mxu0
        %v1142 = vadd.f32 %v1053, %v1141
        %v1143 = vpop.f32.mrf.mxu0
        %v1144 = vadd.f32 %v1055, %v1143
        %1145 = vmatmul.bf16.gmra.mxu0 %v608
        %v1146 = vpop.f32.mrf.mxu0
        %v1147 = vadd.f32 %v1058, %v1146
        %v1148 = vpop.f32.mrf.mxu0
        %v1149 = vadd.f32 %v1060, %v1148
        %1150 = vmatmul.bf16.gmra.mxu0 %v610
        %v1151 = vpop.f32.mrf.mxu0
        %v1152 = vadd.f32 %v1063, %v1151
        %v1153 = vpop.f32.mrf.mxu0
        %v1154 = vadd.f32 %v1065, %v1153
        %1155 = vmatmul.bf16.gmra.mxu0 %v612
        %v1156 = vpop.f32.mrf.mxu0
        %v1157 = vadd.f32 %v1068, %v1156
        %v1158 = vpop.f32.mrf.mxu0
        %v1159 = vadd.f32 %v1070, %v1158
        %1160 = vdwg.mxu0
        %v1161 = vpack.c.bf16 %v1082, %v904
        %v1162 = vpack.c.bf16 %v1084, %v906
        %v1163 = vpack.c.bf16 %v1087, %v909
        %v1164 = vpack.c.bf16 %v1089, %v911
        %v1165 = vpack.c.bf16 %v1092, %v914
        %v1166 = vpack.c.bf16 %v1094, %v916
        %v1167 = vpack.c.bf16 %v1097, %v919
        %v1168 = vpack.c.bf16 %v1099, %v921
        %v1169 = vpack.c.bf16 %v1102, %v924
        %v1170 = vpack.c.bf16 %v1104, %v926
        %v1171 = vpack.c.bf16 %v1107, %v929
        %v1172 = vpack.c.bf16 %v1109, %v931
        %v1173 = vpack.c.bf16 %v1112, %v934
        %v1174 = vpack.c.bf16 %v1114, %v936
        %v1175 = vpack.c.bf16 %v1117, %v939
        %v1176 = vpack.c.bf16 %v1119, %v941
        %v1177 = vpack.c.bf16 %v1122, %v944
        %v1178 = vpack.c.bf16 %v1124, %v946
        %v1179 = vpack.c.bf16 %v1127, %v949
        %v1180 = vpack.c.bf16 %v1129, %v951
        %v1181 = vpack.c.bf16 %v1132, %v954
        %v1182 = vpack.c.bf16 %v1134, %v956
        %v1183 = vpack.c.bf16 %v1137, %v959
        %v1184 = vpack.c.bf16 %v1139, %v961
        %v1185 = vpack.c.bf16 %v1142, %v964
        %v1186 = vpack.c.bf16 %v1144, %v966
        %v1187 = vpack.c.bf16 %v1147, %v969
        %v1188 = vpack.c.bf16 %v1149, %v971
        %v1189 = vpack.c.bf16 %v1152, %v974
        %v1190 = vpack.c.bf16 %v1154, %v976
        %v1191 = vpack.c.bf16 %v1157, %v979
        %v1192 = vpack.c.bf16 %v1159, %v981
        %1193 = vst [vmem:[%s403] sm:$0xff] %v1161
        %1194 = vst [vmem:[%s403 + $0x8] sm:$0xff] %v1162
        %1195 = vst [vmem:[%s403 + $0x10] sm:$0xff] %v1163
        %1196 = vst [vmem:[%s403 + $0x18] sm:$0xff] %v1164
        %1197 = vst [vmem:[%s403 + $0x20] sm:$0xff] %v1165
        %1198 = vst [vmem:[%s403 + $0x28] sm:$0xff] %v1166
        %1199 = vst [vmem:[%s403 + $0x30] sm:$0xff] %v1167
        %1200 = vst [vmem:[%s403 + $0x38] sm:$0xff] %v1168
        %1201 = vst [vmem:[%s403 + $0x40] sm:$0xff] %v1169
        %1202 = vst [vmem:[%s403 + $0x48] sm:$0xff] %v1170
        %1203 = vst [vmem:[%s403 + $0x50] sm:$0xff] %v1171
        %1204 = vst [vmem:[%s403 + $0x58] sm:$0xff] %v1172
        %1205 = vst [vmem:[%s403 + $0x60] sm:$0xff] %v1173
        %1206 = vst [vmem:[%s403 + $0x68] sm:$0xff] %v1174
        %1207 = vst [vmem:[%s403 + $0x70] sm:$0xff] %v1175
        %1208 = vst [vmem:[%s403 + $0x78] sm:$0xff] %v1176
        %1209 = vst [vmem:[%s403 + $0x80] sm:$0xff] %v1177
        %1210 = vst [vmem:[%s403 + $0x88] sm:$0xff] %v1178
        %1211 = vst [vmem:[%s403 + $0x90] sm:$0xff] %v1179
        %1212 = vst [vmem:[%s403 + $0x98] sm:$0xff] %v1180
        %1213 = vst [vmem:[%s403 + $0xa0] sm:$0xff] %v1181
        %1214 = vst [vmem:[%s403 + $0xa8] sm:$0xff] %v1182
        %1215 = vst [vmem:[%s403 + $0xb0] sm:$0xff] %v1183
        %1216 = vst [vmem:[%s403 + $0xb8] sm:$0xff] %v1184
        %1217 = vst [vmem:[%s403 + $0xc0] sm:$0xff] %v1185
        %1218 = vst [vmem:[%s403 + $0xc8] sm:$0xff] %v1186
        %1219 = vst [vmem:[%s403 + $0xd0] sm:$0xff] %v1187
        %1220 = vst [vmem:[%s403 + $0xd8] sm:$0xff] %v1188
        %1221 = vst [vmem:[%s403 + $0xe0] sm:$0xff] %v1189
        %1222 = vst [vmem:[%s403 + $0xe8] sm:$0xff] %v1190
        %1223 = vst [vmem:[%s403 + $0xf0] sm:$0xff] %v1191
        %1224 = vst [vmem:[%s403 + $0xf8] sm:$0xff] %v1192
        %v1225 = vld [vmem:[%s359] sm:$0xff]
        %v1226 = vld [vmem:[%s359 + $0x8] sm:$0xff]
        %v1227 = vld [vmem:[%s359 + $0x10] sm:$0xff]
        %v1228 = vld [vmem:[%s359 + $0x18] sm:$0xff]
        %v1229 = vld [vmem:[%s359 + $0x20] sm:$0xff]
        %v1230 = vld [vmem:[%s359 + $0x28] sm:$0xff]
        %v1231 = vld [vmem:[%s359 + $0x30] sm:$0xff]
        %v1232 = vld [vmem:[%s359 + $0x38] sm:$0xff]
        %v1233 = vld [vmem:[%s359 + $0x40] sm:$0xff]
        %v1234 = vld [vmem:[%s359 + $0x48] sm:$0xff]
        %v1235 = vld [vmem:[%s359 + $0x50] sm:$0xff]
        %v1236 = vld [vmem:[%s359 + $0x58] sm:$0xff]
        %v1237 = vld [vmem:[%s359 + $0x60] sm:$0xff]
        %v1238 = vld [vmem:[%s359 + $0x68] sm:$0xff]
        %v1239 = vld [vmem:[%s359 + $0x70] sm:$0xff]
        %v1240 = vld [vmem:[%s359 + $0x78] sm:$0xff]
        %v1241 = vld [vmem:[%s359 + $0x80] sm:$0xff]
        %v1242 = vld [vmem:[%s359 + $0x88] sm:$0xff]
        %v1243 = vld [vmem:[%s359 + $0x90] sm:$0xff]
        %v1244 = vld [vmem:[%s359 + $0x98] sm:$0xff]
        %v1245 = vld [vmem:[%s359 + $0xa0] sm:$0xff]
        %v1246 = vld [vmem:[%s359 + $0xa8] sm:$0xff]
        %v1247 = vld [vmem:[%s359 + $0xb0] sm:$0xff]
        %v1248 = vld [vmem:[%s359 + $0xb8] sm:$0xff]
        %v1249 = vld [vmem:[%s359 + $0xc0] sm:$0xff]
        %v1250 = vld [vmem:[%s359 + $0xc8] sm:$0xff]
        %v1251 = vld [vmem:[%s359 + $0xd0] sm:$0xff]
        %v1252 = vld [vmem:[%s359 + $0xd8] sm:$0xff]
        %v1253 = vld [vmem:[%s359 + $0xe0] sm:$0xff]
        %v1254 = vld [vmem:[%s359 + $0xe8] sm:$0xff]
        %v1255 = vld [vmem:[%s359 + $0xf0] sm:$0xff]
        %v1256 = vld [vmem:[%s359 + $0xf8] sm:$0xff]
        %v1257 = vld [vmem:[#allocation8] sm:$0xff]
        %v1258 = vld [vmem:[#allocation8 + $0x8] sm:$0xff]
        %v1259 = vld [vmem:[#allocation8 + $0x10] sm:$0xff]
        %v1260 = vld [vmem:[#allocation8 + $0x18] sm:$0xff]
        %v1261 = vld [vmem:[#allocation8 + $0x20] sm:$0xff]
        %v1262 = vld [vmem:[#allocation8 + $0x28] sm:$0xff]
        %v1263 = vld [vmem:[#allocation8 + $0x30] sm:$0xff]
        %v1264 = vld [vmem:[#allocation8 + $0x38] sm:$0xff]
        %v1265 = vld [vmem:[#allocation8 + $0x40] sm:$0xff]
        %v1266 = vld [vmem:[#allocation8 + $0x48] sm:$0xff]
        %v1267 = vld [vmem:[#allocation8 + $0x50] sm:$0xff]
        %v1268 = vld [vmem:[#allocation8 + $0x58] sm:$0xff]
        %v1269 = vld [vmem:[#allocation8 + $0x60] sm:$0xff]
        %v1270 = vld [vmem:[#allocation8 + $0x68] sm:$0xff]
        %v1271 = vld [vmem:[#allocation8 + $0x70] sm:$0xff]
        %v1272 = vld [vmem:[#allocation8 + $0x78] sm:$0xff]
        %v1273 = vld [vmem:[#allocation8 + $0x80] sm:$0xff]
        %v1274 = vld [vmem:[#allocation8 + $0x88] sm:$0xff]
        %v1275 = vld [vmem:[#allocation8 + $0x90] sm:$0xff]
        %v1276 = vld [vmem:[#allocation8 + $0x98] sm:$0xff]
        %v1277 = vld [vmem:[#allocation8 + $0xa0] sm:$0xff]
        %v1278 = vld [vmem:[#allocation8 + $0xa8] sm:$0xff]
        %v1279 = vld [vmem:[#allocation8 + $0xb0] sm:$0xff]
        %v1280 = vld [vmem:[#allocation8 + $0xb8] sm:$0xff]
        %v1281 = vld [vmem:[#allocation8 + $0xc0] sm:$0xff]
        %v1282 = vld [vmem:[#allocation8 + $0xc8] sm:$0xff]
        %v1283 = vld [vmem:[#allocation8 + $0xd0] sm:$0xff]
        %v1284 = vld [vmem:[#allocation8 + $0xd8] sm:$0xff]
        %v1285 = vld [vmem:[#allocation8 + $0xe0] sm:$0xff]
        %v1286 = vld [vmem:[#allocation8 + $0xe8] sm:$0xff]
        %v1287 = vld [vmem:[#allocation8 + $0xf0] sm:$0xff]
        %v1288 = vld [vmem:[#allocation8 + $0xf8] sm:$0xff]
        %v1289 = vld [vmem:[%s5] sm:$0x3]
        %v1291 = vperm.slane %v1289, 0
        %v1292 = vperm.slane %v1289, 1
        %v1327 = vunpack.c.l.b16 %v1225
        %v1328 = vunpack.c.h.b16 %v1225
        %v1329 = vunpack.c.l.b16 %v1226
        %v1330 = vunpack.c.h.b16 %v1226
        %v1331 = vunpack.c.l.b16 %v1227
        %v1332 = vunpack.c.h.b16 %v1227
        %v1333 = vunpack.c.l.b16 %v1228
        %v1334 = vunpack.c.h.b16 %v1228
        %v1335 = vunpack.c.l.b16 %v1229
        %v1336 = vunpack.c.h.b16 %v1229
        %v1337 = vunpack.c.l.b16 %v1230
        %v1338 = vunpack.c.h.b16 %v1230
        %v1339 = vunpack.c.l.b16 %v1231
        %v1340 = vunpack.c.h.b16 %v1231
        %v1341 = vunpack.c.l.b16 %v1232
        %v1342 = vunpack.c.h.b16 %v1232
        %v1343 = vunpack.c.l.b16 %v1233
        %v1344 = vunpack.c.h.b16 %v1233
        %v1345 = vunpack.c.l.b16 %v1234
        %v1346 = vunpack.c.h.b16 %v1234
        %v1347 = vunpack.c.l.b16 %v1235
        %v1348 = vunpack.c.h.b16 %v1235
        %v1349 = vunpack.c.l.b16 %v1236
        %v1350 = vunpack.c.h.b16 %v1236
        %v1351 = vunpack.c.l.b16 %v1237
        %v1352 = vunpack.c.h.b16 %v1237
        %v1353 = vunpack.c.l.b16 %v1238
        %v1354 = vunpack.c.h.b16 %v1238
        %v1355 = vunpack.c.l.b16 %v1239
        %v1356 = vunpack.c.h.b16 %v1239
        %v1357 = vunpack.c.l.b16 %v1240
        %v1358 = vunpack.c.h.b16 %v1240
        %v1359 = vunpack.c.l.b16 %v1241
        %v1360 = vunpack.c.h.b16 %v1241
        %v1361 = vunpack.c.l.b16 %v1242
        %v1362 = vunpack.c.h.b16 %v1242
        %v1363 = vunpack.c.l.b16 %v1243
        %v1364 = vunpack.c.h.b16 %v1243
        %v1365 = vunpack.c.l.b16 %v1244
        %v1366 = vunpack.c.h.b16 %v1244
        %v1367 = vunpack.c.l.b16 %v1245
        %v1368 = vunpack.c.h.b16 %v1245
        %v1369 = vunpack.c.l.b16 %v1246
        %v1370 = vunpack.c.h.b16 %v1246
        %v1371 = vunpack.c.l.b16 %v1247
        %v1372 = vunpack.c.h.b16 %v1247
        %v1373 = vunpack.c.l.b16 %v1248
        %v1374 = vunpack.c.h.b16 %v1248
        %v1375 = vunpack.c.l.b16 %v1249
        %v1376 = vunpack.c.h.b16 %v1249
        %v1377 = vunpack.c.l.b16 %v1250
        %v1378 = vunpack.c.h.b16 %v1250
        %v1379 = vunpack.c.l.b16 %v1251
        %v1380 = vunpack.c.h.b16 %v1251
        %v1381 = vunpack.c.l.b16 %v1252
        %v1382 = vunpack.c.h.b16 %v1252
        %v1383 = vunpack.c.l.b16 %v1253
        %v1384 = vunpack.c.h.b16 %v1253
        %v1385 = vunpack.c.l.b16 %v1254
        %v1386 = vunpack.c.h.b16 %v1254
        %v1387 = vunpack.c.l.b16 %v1255
        %v1388 = vunpack.c.h.b16 %v1255
        %v1389 = vunpack.c.l.b16 %v1256
        %v1390 = vunpack.c.h.b16 %v1256
        %v1391 = vpack.c.b16 %v1329, %v1327
        %v1392 = vpack.c.b16 %v1330, %v1328
        %v1393 = vpack.c.b16 %v1333, %v1331
        %v1394 = vpack.c.b16 %v1334, %v1332
        %v1395 = vpack.c.b16 %v1337, %v1335
        %v1396 = vpack.c.b16 %v1338, %v1336
        %v1397 = vpack.c.b16 %v1341, %v1339
        %v1398 = vpack.c.b16 %v1342, %v1340
        %v1399 = vpack.c.b16 %v1345, %v1343
        %v1400 = vpack.c.b16 %v1346, %v1344
        %v1401 = vpack.c.b16 %v1349, %v1347
        %v1402 = vpack.c.b16 %v1350, %v1348
        %v1403 = vpack.c.b16 %v1353, %v1351
        %v1404 = vpack.c.b16 %v1354, %v1352
        %v1405 = vpack.c.b16 %v1357, %v1355
        %v1406 = vpack.c.b16 %v1358, %v1356
        %v1407 = vpack.c.b16 %v1361, %v1359
        %v1408 = vpack.c.b16 %v1362, %v1360
        %v1409 = vpack.c.b16 %v1365, %v1363
        %v1410 = vpack.c.b16 %v1366, %v1364
        %v1411 = vpack.c.b16 %v1369, %v1367
        %v1412 = vpack.c.b16 %v1370, %v1368
        %v1413 = vpack.c.b16 %v1373, %v1371
        %v1414 = vpack.c.b16 %v1374, %v1372
        %v1415 = vpack.c.b16 %v1377, %v1375
        %v1416 = vpack.c.b16 %v1378, %v1376
        %v1417 = vpack.c.b16 %v1381, %v1379
        %v1418 = vpack.c.b16 %v1382, %v1380
        %v1419 = vpack.c.b16 %v1385, %v1383
        %v1420 = vpack.c.b16 %v1386, %v1384
        %v1421 = vpack.c.b16 %v1389, %v1387
        %v1422 = vpack.c.b16 %v1390, %v1388
        %v1487 = vunpack.c.l.b16 %v1257
        %v1488 = vunpack.c.h.b16 %v1257
        %v1489 = vunpack.c.l.b16 %v1258
        %v1490 = vunpack.c.h.b16 %v1258
        %v1491 = vunpack.c.l.b16 %v1259
        %v1492 = vunpack.c.h.b16 %v1259
        %v1493 = vunpack.c.l.b16 %v1260
        %v1494 = vunpack.c.h.b16 %v1260
        %v1495 = vunpack.c.l.b16 %v1261
        %v1496 = vunpack.c.h.b16 %v1261
        %v1497 = vunpack.c.l.b16 %v1262
        %v1498 = vunpack.c.h.b16 %v1262
        %v1499 = vunpack.c.l.b16 %v1263
        %v1500 = vunpack.c.h.b16 %v1263
        %v1501 = vunpack.c.l.b16 %v1264
        %v1502 = vunpack.c.h.b16 %v1264
        %v1503 = vunpack.c.l.b16 %v1265
        %v1504 = vunpack.c.h.b16 %v1265
        %v1505 = vunpack.c.l.b16 %v1266
        %v1506 = vunpack.c.h.b16 %v1266
        %v1507 = vunpack.c.l.b16 %v1267
        %v1508 = vunpack.c.h.b16 %v1267
        %v1509 = vunpack.c.l.b16 %v1268
        %v1510 = vunpack.c.h.b16 %v1268
        %v1511 = vunpack.c.l.b16 %v1269
        %v1512 = vunpack.c.h.b16 %v1269
        %v1513 = vunpack.c.l.b16 %v1270
        %v1514 = vunpack.c.h.b16 %v1270
        %v1515 = vunpack.c.l.b16 %v1271
        %v1516 = vunpack.c.h.b16 %v1271
        %v1517 = vunpack.c.l.b16 %v1272
        %v1518 = vunpack.c.h.b16 %v1272
        %v1519 = vunpack.c.l.b16 %v1273
        %v1520 = vunpack.c.h.b16 %v1273
        %v1521 = vunpack.c.l.b16 %v1274
        %v1522 = vunpack.c.h.b16 %v1274
        %v1523 = vunpack.c.l.b16 %v1275
        %v1524 = vunpack.c.h.b16 %v1275
        %v1525 = vunpack.c.l.b16 %v1276
        %v1526 = vunpack.c.h.b16 %v1276
        %v1527 = vunpack.c.l.b16 %v1277
        %v1528 = vunpack.c.h.b16 %v1277
        %v1529 = vunpack.c.l.b16 %v1278
        %v1530 = vunpack.c.h.b16 %v1278
        %v1531 = vunpack.c.l.b16 %v1279
        %v1532 = vunpack.c.h.b16 %v1279
        %v1533 = vunpack.c.l.b16 %v1280
        %v1534 = vunpack.c.h.b16 %v1280
        %v1535 = vunpack.c.l.b16 %v1281
        %v1536 = vunpack.c.h.b16 %v1281
        %v1537 = vunpack.c.l.b16 %v1282
        %v1538 = vunpack.c.h.b16 %v1282
        %v1539 = vunpack.c.l.b16 %v1283
        %v1540 = vunpack.c.h.b16 %v1283
        %v1541 = vunpack.c.l.b16 %v1284
        %v1542 = vunpack.c.h.b16 %v1284
        %v1543 = vunpack.c.l.b16 %v1285
        %v1544 = vunpack.c.h.b16 %v1285
        %v1545 = vunpack.c.l.b16 %v1286
        %v1546 = vunpack.c.h.b16 %v1286
        %v1547 = vunpack.c.l.b16 %v1287
        %v1548 = vunpack.c.h.b16 %v1287
        %v1549 = vunpack.c.l.b16 %v1288
        %v1550 = vunpack.c.h.b16 %v1288
        %v1551 = vpack.c.b16 %v1489, %v1487
        %v1552 = vpack.c.b16 %v1490, %v1488
        %v1553 = vpack.c.b16 %v1493, %v1491
        %v1554 = vpack.c.b16 %v1494, %v1492
        %v1555 = vpack.c.b16 %v1497, %v1495
        %v1556 = vpack.c.b16 %v1498, %v1496
        %v1557 = vpack.c.b16 %v1501, %v1499
        %v1558 = vpack.c.b16 %v1502, %v1500
        %v1559 = vpack.c.b16 %v1505, %v1503
        %v1560 = vpack.c.b16 %v1506, %v1504
        %v1561 = vpack.c.b16 %v1509, %v1507
        %v1562 = vpack.c.b16 %v1510, %v1508
        %v1563 = vpack.c.b16 %v1513, %v1511
        %v1564 = vpack.c.b16 %v1514, %v1512
        %v1565 = vpack.c.b16 %v1517, %v1515
        %v1566 = vpack.c.b16 %v1518, %v1516
        %v1567 = vpack.c.b16 %v1521, %v1519
        %v1568 = vpack.c.b16 %v1522, %v1520
        %v1569 = vpack.c.b16 %v1525, %v1523
        %v1570 = vpack.c.b16 %v1526, %v1524
        %v1571 = vpack.c.b16 %v1529, %v1527
        %v1572 = vpack.c.b16 %v1530, %v1528
        %v1573 = vpack.c.b16 %v1533, %v1531
        %v1574 = vpack.c.b16 %v1534, %v1532
        %v1575 = vpack.c.b16 %v1537, %v1535
        %v1576 = vpack.c.b16 %v1538, %v1536
        %v1577 = vpack.c.b16 %v1541, %v1539
        %v1578 = vpack.c.b16 %v1542, %v1540
        %v1579 = vpack.c.b16 %v1545, %v1543
        %v1580 = vpack.c.b16 %v1546, %v1544
        %v1581 = vpack.c.b16 %v1549, %v1547
        %v1582 = vpack.c.b16 %v1550, %v1548
        %1615 = vmatpush.bf16.msra.mxu0 %v1565
        %1616 = vmatpush.bf16.msra.mxu0 %v1563
        %1617 = vmatpush.bf16.msra.mxu0 %v1561
        %1618 = vmatpush.bf16.msra.mxu0 %v1559
        %1619 = vmatpush.bf16.msra.mxu0 %v1557
        %1620 = vmatpush.bf16.msra.mxu0 %v1555
        %1621 = vmatpush.bf16.msra.mxu0 %v1553
        %1622 = vmatpush.bf16.msra.mxu0 %v1551
        %1623 = vmatmul.bf16.gmra.mxu0 %v1391
        %v1624 = vpop.f32.mrf.mxu0
        %v1625 = vadd.f32 %v1291, %v1624
        %v1626 = vpop.f32.mrf.mxu0
        %v1627 = vadd.f32 %v1291, %v1626
        %1628 = vmatmul.bf16.gmra.mxu0 %v1393
        %v1629 = vpop.f32.mrf.mxu0
        %v1630 = vadd.f32 %v1291, %v1629
        %v1631 = vpop.f32.mrf.mxu0
        %v1632 = vadd.f32 %v1291, %v1631
        %1633 = vmatmul.bf16.gmra.mxu0 %v1395
        %v1634 = vpop.f32.mrf.mxu0
        %v1635 = vadd.f32 %v1291, %v1634
        %v1636 = vpop.f32.mrf.mxu0
        %v1637 = vadd.f32 %v1291, %v1636
        %1638 = vmatmul.bf16.gmra.mxu0 %v1397
        %v1639 = vpop.f32.mrf.mxu0
        %v1640 = vadd.f32 %v1291, %v1639
        %v1641 = vpop.f32.mrf.mxu0
        %v1642 = vadd.f32 %v1291, %v1641
        %1643 = vmatmul.bf16.gmra.mxu0 %v1399
        %v1644 = vpop.f32.mrf.mxu0
        %v1645 = vadd.f32 %v1291, %v1644
        %v1646 = vpop.f32.mrf.mxu0
        %v1647 = vadd.f32 %v1291, %v1646
        %1648 = vmatmul.bf16.gmra.mxu0 %v1401
        %v1649 = vpop.f32.mrf.mxu0
        %v1650 = vadd.f32 %v1291, %v1649
        %v1651 = vpop.f32.mrf.mxu0
        %v1652 = vadd.f32 %v1291, %v1651
        %1653 = vmatmul.bf16.gmra.mxu0 %v1403
        %v1654 = vpop.f32.mrf.mxu0
        %v1655 = vadd.f32 %v1291, %v1654
        %v1656 = vpop.f32.mrf.mxu0
        %v1657 = vadd.f32 %v1291, %v1656
        %1658 = vmatmul.bf16.gmra.mxu0 %v1405
        %v1659 = vpop.f32.mrf.mxu0
        %v1660 = vadd.f32 %v1291, %v1659
        %v1661 = vpop.f32.mrf.mxu0
        %v1662 = vadd.f32 %v1291, %v1661
        %1663 = vmatmul.bf16.gmra.mxu0 %v1407
        %v1664 = vpop.f32.mrf.mxu0
        %v1665 = vadd.f32 %v1291, %v1664
        %v1666 = vpop.f32.mrf.mxu0
        %v1667 = vadd.f32 %v1291, %v1666
        %1668 = vmatmul.bf16.gmra.mxu0 %v1409
        %v1669 = vpop.f32.mrf.mxu0
        %v1670 = vadd.f32 %v1291, %v1669
        %v1671 = vpop.f32.mrf.mxu0
        %v1672 = vadd.f32 %v1291, %v1671
        %1673 = vmatmul.bf16.gmra.mxu0 %v1411
        %v1674 = vpop.f32.mrf.mxu0
        %v1675 = vadd.f32 %v1291, %v1674
        %v1676 = vpop.f32.mrf.mxu0
        %v1677 = vadd.f32 %v1291, %v1676
        %1678 = vmatmul.bf16.gmra.mxu0 %v1413
        %v1679 = vpop.f32.mrf.mxu0
        %v1680 = vadd.f32 %v1291, %v1679
        %v1681 = vpop.f32.mrf.mxu0
        %v1682 = vadd.f32 %v1291, %v1681
        %1683 = vmatmul.bf16.gmra.mxu0 %v1415
        %v1684 = vpop.f32.mrf.mxu0
        %v1685 = vadd.f32 %v1291, %v1684
        %v1686 = vpop.f32.mrf.mxu0
        %v1687 = vadd.f32 %v1291, %v1686
        %1688 = vmatmul.bf16.gmra.mxu0 %v1417
        %v1689 = vpop.f32.mrf.mxu0
        %v1690 = vadd.f32 %v1291, %v1689
        %v1691 = vpop.f32.mrf.mxu0
        %v1692 = vadd.f32 %v1291, %v1691
        %1693 = vmatmul.bf16.gmra.mxu0 %v1419
        %v1694 = vpop.f32.mrf.mxu0
        %v1695 = vadd.f32 %v1291, %v1694
        %v1696 = vpop.f32.mrf.mxu0
        %v1697 = vadd.f32 %v1291, %v1696
        %1698 = vmatmul.bf16.gmra.mxu0 %v1421
        %v1699 = vpop.f32.mrf.mxu0
        %v1700 = vadd.f32 %v1291, %v1699
        %v1701 = vpop.f32.mrf.mxu0
        %v1702 = vadd.f32 %v1291, %v1701
        %1703 = vdwg.mxu0
        %1704 = vmatpush.bf16.msra.mxu0 %v1581
        %1705 = vmatpush.bf16.msra.mxu0 %v1579
        %1706 = vmatpush.bf16.msra.mxu0 %v1577
        %1707 = vmatpush.bf16.msra.mxu0 %v1575
        %1708 = vmatpush.bf16.msra.mxu0 %v1573
        %1709 = vmatpush.bf16.msra.mxu0 %v1571
        %1710 = vmatpush.bf16.msra.mxu0 %v1569
        %1711 = vmatpush.bf16.msra.mxu0 %v1567
        %1712 = vmatmul.bf16.gmra.mxu0 %v1392
        %v1713 = vpop.f32.mrf.mxu0
        %v1714 = vadd.f32 %v1625, %v1713
        %v1715 = vpop.f32.mrf.mxu0
        %v1716 = vadd.f32 %v1627, %v1715
        %1717 = vmatmul.bf16.gmra.mxu0 %v1394
        %v1718 = vpop.f32.mrf.mxu0
        %v1719 = vadd.f32 %v1630, %v1718
        %v1720 = vpop.f32.mrf.mxu0
        %v1721 = vadd.f32 %v1632, %v1720
        %1722 = vmatmul.bf16.gmra.mxu0 %v1396
        %v1723 = vpop.f32.mrf.mxu0
        %v1724 = vadd.f32 %v1635, %v1723
        %v1725 = vpop.f32.mrf.mxu0
        %v1726 = vadd.f32 %v1637, %v1725
        %1727 = vmatmul.bf16.gmra.mxu0 %v1398
        %v1728 = vpop.f32.mrf.mxu0
        %v1729 = vadd.f32 %v1640, %v1728
        %v1730 = vpop.f32.mrf.mxu0
        %v1731 = vadd.f32 %v1642, %v1730
        %1732 = vmatmul.bf16.gmra.mxu0 %v1400
        %v1733 = vpop.f32.mrf.mxu0
        %v1734 = vadd.f32 %v1645, %v1733
        %v1735 = vpop.f32.mrf.mxu0
        %v1736 = vadd.f32 %v1647, %v1735
        %1737 = vmatmul.bf16.gmra.mxu0 %v1402
        %v1738 = vpop.f32.mrf.mxu0
        %v1739 = vadd.f32 %v1650, %v1738
        %v1740 = vpop.f32.mrf.mxu0
        %v1741 = vadd.f32 %v1652, %v1740
        %1742 = vmatmul.bf16.gmra.mxu0 %v1404
        %v1743 = vpop.f32.mrf.mxu0
        %v1744 = vadd.f32 %v1655, %v1743
        %v1745 = vpop.f32.mrf.mxu0
        %v1746 = vadd.f32 %v1657, %v1745
        %1747 = vmatmul.bf16.gmra.mxu0 %v1406
        %v1748 = vpop.f32.mrf.mxu0
        %v1749 = vadd.f32 %v1660, %v1748
        %v1750 = vpop.f32.mrf.mxu0
        %v1751 = vadd.f32 %v1662, %v1750
        %1752 = vmatmul.bf16.gmra.mxu0 %v1408
        %v1753 = vpop.f32.mrf.mxu0
        %v1754 = vadd.f32 %v1665, %v1753
        %v1755 = vpop.f32.mrf.mxu0
        %v1756 = vadd.f32 %v1667, %v1755
        %1757 = vmatmul.bf16.gmra.mxu0 %v1410
        %v1758 = vpop.f32.mrf.mxu0
        %v1759 = vadd.f32 %v1670, %v1758
        %v1760 = vpop.f32.mrf.mxu0
        %v1761 = vadd.f32 %v1672, %v1760
        %1762 = vmatmul.bf16.gmra.mxu0 %v1412
        %v1763 = vpop.f32.mrf.mxu0
        %v1764 = vadd.f32 %v1675, %v1763
        %v1765 = vpop.f32.mrf.mxu0
        %v1766 = vadd.f32 %v1677, %v1765
        %1767 = vmatmul.bf16.gmra.mxu0 %v1414
        %v1768 = vpop.f32.mrf.mxu0
        %v1769 = vadd.f32 %v1680, %v1768
        %v1770 = vpop.f32.mrf.mxu0
        %v1771 = vadd.f32 %v1682, %v1770
        %1772 = vmatmul.bf16.gmra.mxu0 %v1416
        %v1773 = vpop.f32.mrf.mxu0
        %v1774 = vadd.f32 %v1685, %v1773
        %v1775 = vpop.f32.mrf.mxu0
        %v1776 = vadd.f32 %v1687, %v1775
        %1777 = vmatmul.bf16.gmra.mxu0 %v1418
        %v1778 = vpop.f32.mrf.mxu0
        %v1779 = vadd.f32 %v1690, %v1778
        %v1780 = vpop.f32.mrf.mxu0
        %v1781 = vadd.f32 %v1692, %v1780
        %1782 = vmatmul.bf16.gmra.mxu0 %v1420
        %v1783 = vpop.f32.mrf.mxu0
        %v1784 = vadd.f32 %v1695, %v1783
        %v1785 = vpop.f32.mrf.mxu0
        %v1786 = vadd.f32 %v1697, %v1785
        %1787 = vmatmul.bf16.gmra.mxu0 %v1422
        %v1788 = vpop.f32.mrf.mxu0
        %v1789 = vadd.f32 %v1700, %v1788
        %v1790 = vpop.f32.mrf.mxu0
        %v1791 = vadd.f32 %v1702, %v1790
        %1792 = vdwg.mxu0
        %1793 = vmatpush.bf16.msra.mxu0 %v1566
        %1794 = vmatpush.bf16.msra.mxu0 %v1564
        %1795 = vmatpush.bf16.msra.mxu0 %v1562
        %1796 = vmatpush.bf16.msra.mxu0 %v1560
        %1797 = vmatpush.bf16.msra.mxu0 %v1558
        %1798 = vmatpush.bf16.msra.mxu0 %v1556
        %1799 = vmatpush.bf16.msra.mxu0 %v1554
        %1800 = vmatpush.bf16.msra.mxu0 %v1552
        %1801 = vmatmul.bf16.gmra.mxu0 %v1391
        %v1802 = vpop.f32.mrf.mxu0
        %v1803 = vadd.f32 %v1292, %v1802
        %v1804 = vpop.f32.mrf.mxu0
        %v1805 = vadd.f32 %v1292, %v1804
        %1806 = vmatmul.bf16.gmra.mxu0 %v1393
        %v1807 = vpop.f32.mrf.mxu0
        %v1808 = vadd.f32 %v1292, %v1807
        %v1809 = vpop.f32.mrf.mxu0
        %v1810 = vadd.f32 %v1292, %v1809
        %1811 = vmatmul.bf16.gmra.mxu0 %v1395
        %v1812 = vpop.f32.mrf.mxu0
        %v1813 = vadd.f32 %v1292, %v1812
        %v1814 = vpop.f32.mrf.mxu0
        %v1815 = vadd.f32 %v1292, %v1814
        %1816 = vmatmul.bf16.gmra.mxu0 %v1397
        %v1817 = vpop.f32.mrf.mxu0
        %v1818 = vadd.f32 %v1292, %v1817
        %v1819 = vpop.f32.mrf.mxu0
        %v1820 = vadd.f32 %v1292, %v1819
        %1821 = vmatmul.bf16.gmra.mxu0 %v1399
        %v1822 = vpop.f32.mrf.mxu0
        %v1823 = vadd.f32 %v1292, %v1822
        %v1824 = vpop.f32.mrf.mxu0
        %v1825 = vadd.f32 %v1292, %v1824
        %1826 = vmatmul.bf16.gmra.mxu0 %v1401
        %v1827 = vpop.f32.mrf.mxu0
        %v1828 = vadd.f32 %v1292, %v1827
        %v1829 = vpop.f32.mrf.mxu0
        %v1830 = vadd.f32 %v1292, %v1829
        %1831 = vmatmul.bf16.gmra.mxu0 %v1403
        %v1832 = vpop.f32.mrf.mxu0
        %v1833 = vadd.f32 %v1292, %v1832
        %v1834 = vpop.f32.mrf.mxu0
        %v1835 = vadd.f32 %v1292, %v1834
        %1836 = vmatmul.bf16.gmra.mxu0 %v1405
        %v1837 = vpop.f32.mrf.mxu0
        %v1838 = vadd.f32 %v1292, %v1837
        %v1839 = vpop.f32.mrf.mxu0
        %v1840 = vadd.f32 %v1292, %v1839
        %1841 = vmatmul.bf16.gmra.mxu0 %v1407
        %v1842 = vpop.f32.mrf.mxu0
        %v1843 = vadd.f32 %v1292, %v1842
        %v1844 = vpop.f32.mrf.mxu0
        %v1845 = vadd.f32 %v1292, %v1844
        %1846 = vmatmul.bf16.gmra.mxu0 %v1409
        %v1847 = vpop.f32.mrf.mxu0
        %v1848 = vadd.f32 %v1292, %v1847
        %v1849 = vpop.f32.mrf.mxu0
        %v1850 = vadd.f32 %v1292, %v1849
        %1851 = vmatmul.bf16.gmra.mxu0 %v1411
        %v1852 = vpop.f32.mrf.mxu0
        %v1853 = vadd.f32 %v1292, %v1852
        %v1854 = vpop.f32.mrf.mxu0
        %v1855 = vadd.f32 %v1292, %v1854
        %1856 = vmatmul.bf16.gmra.mxu0 %v1413
        %v1857 = vpop.f32.mrf.mxu0
        %v1858 = vadd.f32 %v1292, %v1857
        %v1859 = vpop.f32.mrf.mxu0
        %v1860 = vadd.f32 %v1292, %v1859
        %1861 = vmatmul.bf16.gmra.mxu0 %v1415
        %v1862 = vpop.f32.mrf.mxu0
        %v1863 = vadd.f32 %v1292, %v1862
        %v1864 = vpop.f32.mrf.mxu0
        %v1865 = vadd.f32 %v1292, %v1864
        %1866 = vmatmul.bf16.gmra.mxu0 %v1417
        %v1867 = vpop.f32.mrf.mxu0
        %v1868 = vadd.f32 %v1292, %v1867
        %v1869 = vpop.f32.mrf.mxu0
        %v1870 = vadd.f32 %v1292, %v1869
        %1871 = vmatmul.bf16.gmra.mxu0 %v1419
        %v1872 = vpop.f32.mrf.mxu0
        %v1873 = vadd.f32 %v1292, %v1872
        %v1874 = vpop.f32.mrf.mxu0
        %v1875 = vadd.f32 %v1292, %v1874
        %1876 = vmatmul.bf16.gmra.mxu0 %v1421
        %v1877 = vpop.f32.mrf.mxu0
        %v1878 = vadd.f32 %v1292, %v1877
        %v1879 = vpop.f32.mrf.mxu0
        %v1880 = vadd.f32 %v1292, %v1879
        %1881 = vdwg.mxu0
        %1882 = vmatpush.bf16.msra.mxu0 %v1582
        %1883 = vmatpush.bf16.msra.mxu0 %v1580
        %1884 = vmatpush.bf16.msra.mxu0 %v1578
        %1885 = vmatpush.bf16.msra.mxu0 %v1576
        %1886 = vmatpush.bf16.msra.mxu0 %v1574
        %1887 = vmatpush.bf16.msra.mxu0 %v1572
        %1888 = vmatpush.bf16.msra.mxu0 %v1570
        %1889 = vmatpush.bf16.msra.mxu0 %v1568
        %1890 = vmatmul.bf16.gmra.mxu0 %v1392
        %v1891 = vpop.f32.mrf.mxu0
        %v1892 = vadd.f32 %v1803, %v1891
        %v1893 = vpop.f32.mrf.mxu0
        %v1894 = vadd.f32 %v1805, %v1893
        %1895 = vmatmul.bf16.gmra.mxu0 %v1394
        %v1896 = vpop.f32.mrf.mxu0
        %v1897 = vadd.f32 %v1808, %v1896
        %v1898 = vpop.f32.mrf.mxu0
        %v1899 = vadd.f32 %v1810, %v1898
        %1900 = vmatmul.bf16.gmra.mxu0 %v1396
        %v1901 = vpop.f32.mrf.mxu0
        %v1902 = vadd.f32 %v1813, %v1901
        %v1903 = vpop.f32.mrf.mxu0
        %v1904 = vadd.f32 %v1815, %v1903
        %1905 = vmatmul.bf16.gmra.mxu0 %v1398
        %v1906 = vpop.f32.mrf.mxu0
        %v1907 = vadd.f32 %v1818, %v1906
        %v1908 = vpop.f32.mrf.mxu0
        %v1909 = vadd.f32 %v1820, %v1908
        %1910 = vmatmul.bf16.gmra.mxu0 %v1400
        %v1911 = vpop.f32.mrf.mxu0
        %v1912 = vadd.f32 %v1823, %v1911
        %v1913 = vpop.f32.mrf.mxu0
        %v1914 = vadd.f32 %v1825, %v1913
        %1915 = vmatmul.bf16.gmra.mxu0 %v1402
        %v1916 = vpop.f32.mrf.mxu0
        %v1917 = vadd.f32 %v1828, %v1916
        %v1918 = vpop.f32.mrf.mxu0
        %v1919 = vadd.f32 %v1830, %v1918
        %1920 = vmatmul.bf16.gmra.mxu0 %v1404
        %v1921 = vpop.f32.mrf.mxu0
        %v1922 = vadd.f32 %v1833, %v1921
        %v1923 = vpop.f32.mrf.mxu0
        %v1924 = vadd.f32 %v1835, %v1923
        %1925 = vmatmul.bf16.gmra.mxu0 %v1406
        %v1926 = vpop.f32.mrf.mxu0
        %v1927 = vadd.f32 %v1838, %v1926
        %v1928 = vpop.f32.mrf.mxu0
        %v1929 = vadd.f32 %v1840, %v1928
        %1930 = vmatmul.bf16.gmra.mxu0 %v1408
        %v1931 = vpop.f32.mrf.mxu0
        %v1932 = vadd.f32 %v1843, %v1931
        %v1933 = vpop.f32.mrf.mxu0
        %v1934 = vadd.f32 %v1845, %v1933
        %1935 = vmatmul.bf16.gmra.mxu0 %v1410
        %v1936 = vpop.f32.mrf.mxu0
        %v1937 = vadd.f32 %v1848, %v1936
        %v1938 = vpop.f32.mrf.mxu0
        %v1939 = vadd.f32 %v1850, %v1938
        %1940 = vmatmul.bf16.gmra.mxu0 %v1412
        %v1941 = vpop.f32.mrf.mxu0
        %v1942 = vadd.f32 %v1853, %v1941
        %v1943 = vpop.f32.mrf.mxu0
        %v1944 = vadd.f32 %v1855, %v1943
        %1945 = vmatmul.bf16.gmra.mxu0 %v1414
        %v1946 = vpop.f32.mrf.mxu0
        %v1947 = vadd.f32 %v1858, %v1946
        %v1948 = vpop.f32.mrf.mxu0
        %v1949 = vadd.f32 %v1860, %v1948
        %1950 = vmatmul.bf16.gmra.mxu0 %v1416
        %v1951 = vpop.f32.mrf.mxu0
        %v1952 = vadd.f32 %v1863, %v1951
        %v1953 = vpop.f32.mrf.mxu0
        %v1954 = vadd.f32 %v1865, %v1953
        %1955 = vmatmul.bf16.gmra.mxu0 %v1418
        %v1956 = vpop.f32.mrf.mxu0
        %v1957 = vadd.f32 %v1868, %v1956
        %v1958 = vpop.f32.mrf.mxu0
        %v1959 = vadd.f32 %v1870, %v1958
        %1960 = vmatmul.bf16.gmra.mxu0 %v1420
        %v1961 = vpop.f32.mrf.mxu0
        %v1962 = vadd.f32 %v1873, %v1961
        %v1963 = vpop.f32.mrf.mxu0
        %v1964 = vadd.f32 %v1875, %v1963
        %1965 = vmatmul.bf16.gmra.mxu0 %v1422
        %v1966 = vpop.f32.mrf.mxu0
        %v1967 = vadd.f32 %v1878, %v1966
        %v1968 = vpop.f32.mrf.mxu0
        %v1969 = vadd.f32 %v1880, %v1968
        %1970 = vdwg.mxu0
        %v1971 = vpack.c.bf16 %v1892, %v1714
        %v1972 = vpack.c.bf16 %v1894, %v1716
        %v1973 = vpack.c.bf16 %v1897, %v1719
        %v1974 = vpack.c.bf16 %v1899, %v1721
        %v1975 = vpack.c.bf16 %v1902, %v1724
        %v1976 = vpack.c.bf16 %v1904, %v1726
        %v1977 = vpack.c.bf16 %v1907, %v1729
        %v1978 = vpack.c.bf16 %v1909, %v1731
        %v1979 = vpack.c.bf16 %v1912, %v1734
        %v1980 = vpack.c.bf16 %v1914, %v1736
        %v1981 = vpack.c.bf16 %v1917, %v1739
        %v1982 = vpack.c.bf16 %v1919, %v1741
        %v1983 = vpack.c.bf16 %v1922, %v1744
        %v1984 = vpack.c.bf16 %v1924, %v1746
        %v1985 = vpack.c.bf16 %v1927, %v1749
        %v1986 = vpack.c.bf16 %v1929, %v1751
        %v1987 = vpack.c.bf16 %v1932, %v1754
        %v1988 = vpack.c.bf16 %v1934, %v1756
        %v1989 = vpack.c.bf16 %v1937, %v1759
        %v1990 = vpack.c.bf16 %v1939, %v1761
        %v1991 = vpack.c.bf16 %v1942, %v1764
        %v1992 = vpack.c.bf16 %v1944, %v1766
        %v1993 = vpack.c.bf16 %v1947, %v1769
        %v1994 = vpack.c.bf16 %v1949, %v1771
        %v1995 = vpack.c.bf16 %v1952, %v1774
        %v1996 = vpack.c.bf16 %v1954, %v1776
        %v1997 = vpack.c.bf16 %v1957, %v1779
        %v1998 = vpack.c.bf16 %v1959, %v1781
        %v1999 = vpack.c.bf16 %v1962, %v1784
        %v2000 = vpack.c.bf16 %v1964, %v1786
        %v2001 = vpack.c.bf16 %v1967, %v1789
        %v2002 = vpack.c.bf16 %v1969, %v1791
        %2003 = vst [vmem:[%s410] sm:$0xff] %v1971
        %2004 = vst [vmem:[%s410 + $0x8] sm:$0xff] %v1972
        %2005 = vst [vmem:[%s410 + $0x10] sm:$0xff] %v1973
        %2006 = vst [vmem:[%s410 + $0x18] sm:$0xff] %v1974
        %2007 = vst [vmem:[%s410 + $0x20] sm:$0xff] %v1975
        %2008 = vst [vmem:[%s410 + $0x28] sm:$0xff] %v1976
        %2009 = vst [vmem:[%s410 + $0x30] sm:$0xff] %v1977
        %2010 = vst [vmem:[%s410 + $0x38] sm:$0xff] %v1978
        %2011 = vst [vmem:[%s410 + $0x40] sm:$0xff] %v1979
        %2012 = vst [vmem:[%s410 + $0x48] sm:$0xff] %v1980
        %2013 = vst [vmem:[%s410 + $0x50] sm:$0xff] %v1981
        %2014 = vst [vmem:[%s410 + $0x58] sm:$0xff] %v1982
        %2015 = vst [vmem:[%s410 + $0x60] sm:$0xff] %v1983
        %2016 = vst [vmem:[%s410 + $0x68] sm:$0xff] %v1984
        %2017 = vst [vmem:[%s410 + $0x70] sm:$0xff] %v1985
        %2018 = vst [vmem:[%s410 + $0x78] sm:$0xff] %v1986
        %2019 = vst [vmem:[%s410 + $0x80] sm:$0xff] %v1987
        %2020 = vst [vmem:[%s410 + $0x88] sm:$0xff] %v1988
        %2021 = vst [vmem:[%s410 + $0x90] sm:$0xff] %v1989
        %2022 = vst [vmem:[%s410 + $0x98] sm:$0xff] %v1990
        %2023 = vst [vmem:[%s410 + $0xa0] sm:$0xff] %v1991
        %2024 = vst [vmem:[%s410 + $0xa8] sm:$0xff] %v1992
        %2025 = vst [vmem:[%s410 + $0xb0] sm:$0xff] %v1993
        %2026 = vst [vmem:[%s410 + $0xb8] sm:$0xff] %v1994
        %2027 = vst [vmem:[%s410 + $0xc0] sm:$0xff] %v1995
        %2028 = vst [vmem:[%s410 + $0xc8] sm:$0xff] %v1996
        %2029 = vst [vmem:[%s410 + $0xd0] sm:$0xff] %v1997
        %2030 = vst [vmem:[%s410 + $0xd8] sm:$0xff] %v1998
        %2031 = vst [vmem:[%s410 + $0xe0] sm:$0xff] %v1999
        %2032 = vst [vmem:[%s410 + $0xe8] sm:$0xff] %v2000
        %2033 = vst [vmem:[%s410 + $0xf0] sm:$0xff] %v2001
        %2034 = vst [vmem:[%s410 + $0xf8] sm:$0xff] %v2002
        %s2035 = sand.u32 %s194, 1
        %s2036 = scalar_lea.sflag [#allocation4], %s2035
        %s2037 = sand.u32 %s194, 1
        %s2038 = smul.addr %s2037, 256
        %s2039 = scalar_lea.vmem [#allocation10], %s2038
        %s2040 = sand.u32 %s222, 1
        %s2041 = scalar_lea.sflag [#allocation12], %s2040
        %s2042 = sand.u32 %s222, 1
        %s2043 = smul.addr %s2042, 256
        %s2044 = scalar_lea.vmem [#allocation11], %s2043
        // Predicated region
        $region61: #{tpu_custom_call.1} parent=43 // pred_check
          %p2045 = pneg %p204
        $region62: #{tpu_custom_call.1} parent=43 // pred_check_branch
          %2047 = sbr.rel (%p2045) target = $region64
        $region63: #{tpu_custom_call.1} parent=43 // pred_region
          %s2048 = smul.u32 32, %s37
          %2050 = vsyncadd %s2036, 0
          %s2051 = smul.addr %s2048, 2
          %s2052 = smul.addr %s36, 64
          %s2053 = sadd.s32 %s2051, %s2052
          %s2054 = smul.addr %s2053, 4
          %s2055 = scalar_lea.hbm %s6, %s2054
          %s2056 = sshll.u32 %s2039, 4
          %s2057 = int_to_ptr.vmem [resolvable:$true] %s2056
          %s2058 = sshll.u32 %s2055, 4
          %s2059 = int_to_ptr.hbm [resolvable:$true] %s2058
          %2064 = dma.vmem_to_hbm [thread:$0]  %s2057, 4096, %s2059, %s2036, 128, 128, 8
        $region64: #{tpu_custom_call.1} parent=43 // pred_fallthru
          _
        // Predicated region
        $region65: #{tpu_custom_call.1} parent=43 // pred_check
          %p2065 = pneg %p232
        $region66: #{tpu_custom_call.1} parent=43 // pred_check_branch
          %2067 = sbr.rel (%p2065) target = $region68
        $region67: #{tpu_custom_call.1} parent=43 // pred_region
          %s2068 = smul.u32 32, %s37
          %2070 = vsyncadd %s2041, 0
          %s2071 = smul.addr %s2068, 2
          %s2072 = smul.addr %s36, 64
          %s2073 = sadd.s32 %s2071, %s2072
          %s2074 = smul.addr %s2073, 4
          %s2075 = scalar_lea.hbm %s7, %s2074
          %s2076 = sshll.u32 %s2044, 4
          %s2077 = int_to_ptr.vmem [resolvable:$true] %s2076
          %s2078 = sshll.u32 %s2075, 4
          %s2079 = int_to_ptr.hbm [resolvable:$true] %s2078
          %2084 = dma.vmem_to_hbm [thread:$0]  %s2077, 4096, %s2079, %s2041, 128, 128, 8
        $region68: #{tpu_custom_call.1} parent=43 // pred_fallthru
          _
      $region44: #{tpu_custom_call.1} parent=5 // pred_fallthru
        _
      %p2085 = scmp.le.s32.totalorder 2, %s27
      // Predicated region
      $region69: #{tpu_custom_call.1} parent=5 // pred_check
        %p2086 = pneg %p2085
      $region70: #{tpu_custom_call.1} parent=5 // pred_check_branch
        %2088 = sbr.rel (%p2086) target = $region72
      $region71: #{tpu_custom_call.1} parent=5 // pred_region
        %s2089 = ssub.s32 %s27, 2
        // Predicated region
        $region73: #{tpu_custom_call.1} parent=71 // pred_check
          %p2090 = pneg %p210
        $region74: #{tpu_custom_call.1} parent=71 // pred_check_branch
          %2092 = sbr.rel (%p2090) target = $region76
        $region75: #{tpu_custom_call.1} parent=71 // pred_region
          %s2093 = sand.u32 %s195, 1
          %s2094 = scalar_lea.sflag [#allocation4], %s2093
          %s2095 = sand.u32 %s195, 1
          %s2096 = smul.addr %s2095, 256
          %s2097 = scalar_lea.vmem [#allocation10], %s2096
          %2099 = dma.done %s2094, 4096
        $region76: #{tpu_custom_call.1} parent=71 // pred_fallthru
          _
        // Predicated region
        $region77: #{tpu_custom_call.1} parent=71 // pred_check
          %p2100 = pneg %p238
        $region78: #{tpu_custom_call.1} parent=71 // pred_check_branch
          %2102 = sbr.rel (%p2100) target = $region80
        $region79: #{tpu_custom_call.1} parent=71 // pred_region
          %s2103 = sand.u32 %s223, 1
          %s2104 = scalar_lea.sflag [#allocation12], %s2103
          %s2105 = sand.u32 %s223, 1
          %s2106 = smul.addr %s2105, 256
          %s2107 = scalar_lea.vmem [#allocation11], %s2106
          %2109 = dma.done %s2104, 4096
        $region80: #{tpu_custom_call.1} parent=71 // pred_fallthru
          _
      $region72: #{tpu_custom_call.1} parent=5 // pred_fallthru
        _
    $region6: #{tpu_custom_call.1} parent=1 // loop_footer
      %s31 = sadd.s32 1, %s27
    $region7: #{tpu_custom_call.1} parent=1 // loop_footer_branch
      %26 = sbr.rel target = $region3
    $region8: #{tpu_custom_call.1} parent=1 // loop_exit
      _
    %2110 = vsyncpa [#allocation3], 1
    %s2111 = scalar_lea.sflag [#allocation3], 1
    %2112 = vsyncpa %s2111, 1
    %2113 = vsyncpa [#allocation6], 1
    %s2114 = scalar_lea.sflag [#allocation6], 1
    %2115 = vsyncpa %s2114, 1
    %2116 = vsyncpa [#allocation9], 1
    %2117 = vsyncpa [#allocation4], 1
    %s2118 = scalar_lea.sflag [#allocation4], 1
    %2119 = vsyncpa %s2118, 1
    %2120 = vsyncpa [#allocation12], 1
    %s2121 = scalar_lea.sflag [#allocation12], 1
    %2122 = vsyncpa %s2121, 1

</llo_original>
